<compile_context>
chip_gen: v6e
topology: v6e:2x2x1
jax: 0.10.0
libtpu: 0.0.40
codegen_flags: <defaults>
</compile_context>

<pallas_src>
import jax
import jax.numpy as jnp
import numpy as np
from jax.experimental import pallas as pl
from jax.experimental.pallas import tpu as pltpu


# ----------------------------- Fused decoder kernel -----------------------------

def _decoder_kernel(x_ref, w1_ref, b1_ref, w2_ref, b2_ref,
                    m1_ref, k1_ref, bc1_ref,
                    m2_ref, k2_ref, bc2_ref,
                    out_ref):
    """Whole Decoder.forward; one grid step = one batch tile (TB rows).

    x_ref:   (TB, latent)                        latent codes
    w1/b1:   (latent, 128) / (1, 128)            FC1 (+ReLU), hidden zero-padded to 128
    w2/b2:   (128, ch*dim^2) / (1, ch*dim^2)     FC2 (+ReLU), columns NCHW-flat
    m1:      (TB, 4*ch*dim^2)      bf16          unpool-1 window-offset 0/1 masks
    k1/bc1:  (4*ch*dim^2, 4*(2dim)^2) bf16, f32  unpool-1 + conv1 folded operator, bias
    m2:      (TB, 4*4*(2dim)^2)    bf16          unpool-2 window-offset 0/1 masks
    k2/bc2:  (4*4*(2dim)^2, (4dim)^2) bf16, f32  unpool-2 + conv2 folded operator, bias
    out_ref: (TB, (4dim)^2)                      final (TB, 1, 4dim, 4dim) NCHW, flat
    """
    f32, bf16 = jnp.float32, jnp.bfloat16

    # Fused FC stack: Linear+ReLU, Linear+ReLU (hidden never leaves VMEM/vregs).
    x = x_ref[...]
    h = jnp.maximum(jnp.dot(x, w1_ref[...], preferred_element_type=f32) + b1_ref[...], 0.0)
    d = jnp.maximum(jnp.dot(h, w2_ref[...], preferred_element_type=f32) + b2_ref[...], 0.0)

    # MaxUnpool2d #1 + Conv2d(ch->4, 3x3, pad 1) + ReLU:
    # replicate pooled activations 4x (one copy per 2x2 offset), zero the copies that
    # don't match the pool index (VPU), then one batched MXU matmul against the conv
    # operator whose rows were pre-gathered to the scatter destinations.
    d4 = jnp.concatenate([d, d, d, d], axis=1).astype(bf16) * m1_ref[...]
    a1 = jnp.maximum(
        jnp.dot(d4, k1_ref[...], preferred_element_type=f32) + bc1_ref[...], 0.0)

    # MaxUnpool2d #2 + Conv2d(4->1, 3x3, pad 1) (no activation).
    a4 = jnp.concatenate([a1, a1, a1, a1], axis=1).astype(bf16) * m2_ref[...]
    y = jnp.dot(a4, k2_ref[...], preferred_element_type=f32) + bc2_ref[...]

    out_ref[...] = y        # single unmasked, lane-dense (multiple-of-128) store


# ----------------------------- Weight / index preprocessing (host-side glue) ---------

def _conv3x3_as_dense(w, H, W):
    """Dense (Cin*H*W, Cout*H*W) matrix equivalent to Conv2d(3x3, stride 1, pad 1)
    acting on NCHW-flat row vectors.  Pure weight preprocessing, done once per weight."""
    Cout, Cin, KH, KW = w.shape
    hw = H * W
    pos = jnp.arange(hw, dtype=jnp.int32)
    r, c = pos // W, pos % W
    kh = jnp.arange(KH, dtype=jnp.int32)
    kw = jnp.arange(KW, dtype=jnp.int32)
    S = ((r[:, None, None, None] == r[None, None, None, :] + kh[None, :, None, None] - (KH // 2)) &
         (c[:, None, None, None] == c[None, None, None, :] + kw[None, None, :, None] - (KW // 2))
         ).astype(w.dtype)
    K4 = jnp.einsum('OCKL,IKLJ->CIOJ', w, S)                     # (Cin, HW, Cout, HW)
    return K4.reshape(Cin * hw, Cout * hw)


def _fold_unpool_rows(kdense, cin, hp, wp):
    """Fold the 2x2 MaxUnpool scatter into a dense conv operator (row gather).

    kdense: (cin*(2hp)*(2wp), dst) conv operator on the UNPOOLED plane.
    Returns (4*cin*hp*wp, dst): row (o*cin*hp*wp + c*hp*wp + h*wp + w) is the operator
    row for unpooled pixel (c, 2h+dh, 2w+dw), with offset o = 2*dh + dw."""
    hw = hp * wp
    c = np.arange(cin)[:, None]
    p = np.arange(hw)[None, :]
    h, w = p // wp, p % wp
    dest = []
    for dh in range(2):
        for dw in range(2):
            dest.append((c * 4 * hw + (2 * h + dh) * (2 * wp) + (2 * w + dw)).reshape(-1))
    dest = np.concatenate(dest).astype(np.int32)
    return jnp.take(kdense, jnp.asarray(dest), axis=0)


def _unpool_masks(ind):
    """(B, C, H, W) MaxPool2d(2, return_indices=True) indices (flat into the (2H, 2W)
    plane, window-local as real pool indices are) -> (B, 4*C*H*W) bf16 0/1 masks in the
    offset-major layout matching _fold_unpool_rows."""
    B, C, H, W = ind.shape
    ind = ind.astype(jnp.int32)
    row, col = ind // (2 * W), ind % (2 * W)
    o = (2 * (row % 2) + (col % 2)).reshape(B, 1, C * H * W)
    sel = o == jnp.arange(4, dtype=jnp.int32).reshape(1, 4, 1)
    return sel.reshape(B, 4 * C * H * W).astype(jnp.bfloat16)


def preprocess_decoder_params(params):
    """Build kernel-ready operands (done once; analogous to weight folding)."""
    dim, ch = params["dim"], params["ch"]
    (w1, b1, _), (w2, b2, _) = params["fc"]
    conv1_w, conv1_b = params["layers"][1][1], params["layers"][1][2]
    conv2_w, conv2_b = params["layers"][4][1], params["layers"][4][2]

    # Pad FC1 hidden (64) to a full 128-lane contraction (zero pad: result is exact).
    hidden = w1.shape[1]
    hpad = ((hidden + 127) // 128) * 128
    w1p = jnp.zeros((w1.shape[0], hpad), jnp.float32).at[:, :hidden].set(w1.astype(jnp.float32))
    b1p = jnp.zeros((1, hpad), jnp.float32).at[0, :hidden].set(b1.astype(jnp.float32))
    w2p = jnp.zeros((hpad, w2.shape[1]), jnp.float32).at[:hidden, :].set(w2.astype(jnp.float32))

    H1 = 2 * dim                      # conv1 runs on (ch, 2dim, 2dim)
    H2 = 4 * dim                      # conv2 runs on (4,  4dim, 4dim)
    k1 = _fold_unpool_rows(_conv3x3_as_dense(conv1_w.astype(jnp.float32), H1, H1),
                           ch, dim, dim).astype(jnp.bfloat16)
    k2 = _fold_unpool_rows(_conv3x3_as_dense(conv2_w.astype(jnp.float32), H2, H2),
                           conv1_w.shape[0], 2 * dim, 2 * dim).astype(jnp.bfloat16)

    return {
        "w1": w1p, "b1": b1p, "w2": w2p,
        "b2": b2[None, :].astype(jnp.float32),
        "k1": k1, "bc1": jnp.repeat(conv1_b.astype(jnp.float32), H1 * H1)[None, :],
        "k2": k2, "bc2": jnp.repeat(conv2_b.astype(jnp.float32), H2 * H2)[None, :],
        "dim": dim, "ch": ch,
    }


# ----------------------------- Decoder forward -----------------------------

def decoder_forward(prep, inp, indices):
    """Faithful port of Decoder.forward (models/vae_unpool.py): FC stack, view to
    (B, ch, dim, dim), then [unpool, conv, relu, unpool, conv] consuming `indices`
    in reverse order.  One batched pallas_call for the whole thing."""
    B = inp.shape[0]
    dim = prep["dim"]

    m1 = _unpool_masks(indices[-1])          # first unpool uses last indices
    m2 = _unpool_masks(indices[-2])          # second unpool uses the previous ones

    # Batch tiling: sublane-aligned tile (multiple of 8 rows), capped at 128 MXU rows.
    TB = min(128, ((B + 7) // 8) * 8)
    Bp = ((B + TB - 1) // TB) * TB
    pad = Bp - B
    x = jnp.pad(inp.astype(jnp.float32), ((0, pad), (0, 0)))
    m1 = jnp.pad(m1, ((0, pad), (0, 0)))
    m2 = jnp.pad(m2, ((0, pad), (0, 0)))

    out_cols = prep["k2"].shape[1]           # Cout2 * (4*dim)^2  (multiple of 128)

    operands = (x, prep["w1"], prep["b1"], prep["w2"], prep["b2"],
                m1, prep["k1"], prep["bc1"], m2, prep["k2"], prep["bc2"])
    total_bytes = sum(int(np.prod(a.shape)) * a.dtype.itemsize for a in operands)
    total_bytes += Bp * out_cols * 4
    vmem_limit = int(min(max(4 * total_bytes, 16 << 20), 64 << 20))

    def batch_spec(cols):
        return pl.BlockSpec((TB, cols), lambda i: (i, 0))

    def const_spec(arr):
        return pl.BlockSpec(arr.shape, lambda i: (0, 0))

    y = pl.pallas_call(
        _decoder_kernel,
        out_shape=jax.ShapeDtypeStruct((Bp, out_cols), jnp.float32),
        grid=(Bp // TB,),
        in_specs=[
            batch_spec(x.shape[1]),
            const_spec(prep["w1"]), const_spec(prep["b1"]),
            const_spec(prep["w2"]), const_spec(prep["b2"]),
            batch_spec(m1.shape[1]), const_spec(prep["k1"]), const_spec(prep["bc1"]),
            batch_spec(m2.shape[1]), const_spec(prep["k2"]), const_spec(prep["bc2"]),
        ],
        out_specs=pl.BlockSpec((TB, out_cols), lambda i: (i, 0)),
        compiler_params=pltpu.CompilerParams(
            dimension_semantics=("parallel",),
            vmem_limit_bytes=vmem_limit),
    )(*operands)

    side = 4 * dim
    out_ch = out_cols // (side * side)
    return y[:B].reshape(B, out_ch, side, side)     # contiguous reshape, free


# ----------------------------- Parameters -----------------------------

def init_decoder_params(key, latent_dim, dim, ch):
    """Mirrors Decoder.__init__: layers_fc = [Linear+ReLU, Linear+ReLU],
    layers = [MaxUnpool2d, Conv2d(ch->4), ReLU, MaxUnpool2d, Conv2d(4->1)]."""
    ks = jax.random.split(key, 8)
    hidden = 64
    fc = [
        (0.1 * jax.random.normal(ks[0], (latent_dim, hidden), jnp.float32),
         0.1 * jax.random.normal(ks[1], (hidden,), jnp.float32), True),
        (0.1 * jax.random.normal(ks[2], (hidden, ch * dim * dim), jnp.float32),
         0.1 * jax.random.normal(ks[3], (ch * dim * dim,), jnp.float32), True),
    ]
    layers = [
        ("unpool",),
        ("conv",
         0.1 * jax.random.normal(ks[4], (4, ch, 3, 3), jnp.float32),
         0.1 * jax.random.normal(ks[5], (4,), jnp.float32)),
        ("relu",),
        ("unpool",),
        ("conv",
         0.1 * jax.random.normal(ks[6], (1, 4, 3, 3), jnp.float32),
         0.1 * jax.random.normal(ks[7], (1,), jnp.float32)),
    ]
    return {"fc": fc, "layers": layers, "dim": dim, "ch": ch}


# ----------------------------- Pure-JAX reference -----------------------------

def _ref_unpool(x, ind):
    B, C, H, W = x.shape
    out = jnp.zeros((B, C, 4 * H * W), jnp.float32)
    scatter = jax.vmap(jax.vmap(lambda o, i, v: o.at[i].set(v)))
    out = scatter(out, ind.reshape(B, C, H * W), x.reshape(B, C, H * W))
    return out.reshape(B, C, 2 * H, 2 * W)


def ref_forward(params, inp, indices):
    ind_idx = len(indices) - 1
    dec = inp
    for (w, b, relu) in params["fc"]:
        dec = dec @ w + b
        if relu:
            dec = jnp.maximum(dec, 0.0)
    dec = dec.reshape(dec.shape[0], params["ch"], params["dim"], params["dim"])
    for layer in params["layers"]:
        if layer[0] == "unpool":
            dec = _ref_unpool(dec, indices[ind_idx])
            ind_idx -= 1
        elif layer[0] == "conv":
            w, b = layer[1], layer[2]
            dec = jax.lax.conv_general_dilated(
                dec, w, (1, 1), "SAME",
                dimension_numbers=("NCHW", "OIHW", "NCHW")) + b.reshape(1, -1, 1, 1)
        else:
            dec = jnp.maximum(dec, 0.0)
    return dec


def make_pool_indices(key, B, C, H, W):
    """Synthetic MaxPool2d(2, return_indices=True) indices: flattened index into the
    (2H, 2W) plane, constrained to each 2x2 window (as real pool indices are)."""
    kh, kw = jax.random.split(key)
    dh = jax.random.randint(kh, (B, C, H, W), 0, 2)
    dw = jax.random.randint(kw, (B, C, H, W), 0, 2)
    h = jnp.arange(H).reshape(1, 1, H, 1)
    w = jnp.arange(W).reshape(1, 1, 1, W)
    return ((2 * h + dh) * (2 * W) + (2 * w + dw)).astype(jnp.int32)


if __name__ == "__main__":
    B, LATENT, DIM, CH = 2, 16, 4, 8
    key = jax.random.PRNGKey(0)
    k_inp, k_par, k_i1, k_i2 = jax.random.split(key, 4)

    params = init_decoder_params(k_par, LATENT, DIM, CH)
    prep = preprocess_decoder_params(params)
    inp = jax.random.normal(k_inp, (B, LATENT), jnp.float32)

    # Encoder-order pooling indices; decoder consumes them in reverse (ind_idx--).
    indices = [
        make_pool_indices(k_i1, B, 4, 2 * DIM, 2 * DIM),   # encoder pool 1 -> 2nd unpool
        make_pool_indices(k_i2, B, CH, DIM, DIM),          # encoder pool 2 -> 1st unpool
    ]

    out = decoder_forward(prep, inp, indices)
    out = jax.block_until_ready(out)

    ref = ref_forward(params, inp, indices)
    assert out.shape == (B, 1, 4 * DIM, 4 * DIM), out.shape
    np.testing.assert_allclose(np.asarray(out), np.asarray(ref), rtol=1e-2, atol=1e-2)

    print("KERNEL_OK")
</pallas_src>

<mosaic_0001>
module attributes {stable_mosaic.version = 11 : i64} {
  func.func @_decoder_kernel(%arg0: i32, %arg1: memref<8x16xf32, #tpu.memory_space<vmem>>, %arg2: memref<16x128xf32, #tpu.memory_space<vmem>>, %arg3: memref<1x128xf32, #tpu.memory_space<vmem>>, %arg4: memref<128x128xf32, #tpu.memory_space<vmem>>, %arg5: memref<1x128xf32, #tpu.memory_space<vmem>>, %arg6: memref<8x512xbf16, #tpu.memory_space<vmem>>, %arg7: memref<512x256xbf16, #tpu.memory_space<vmem>>, %arg8: memref<1x256xf32, #tpu.memory_space<vmem>>, %arg9: memref<8x1024xbf16, #tpu.memory_space<vmem>>, %arg10: memref<1024x256xbf16, #tpu.memory_space<vmem>>, %arg11: memref<1x256xf32, #tpu.memory_space<vmem>>, %arg12: memref<8x256xf32, #tpu.memory_space<vmem>>) attributes {dimension_semantics = [#tpu.dimension_semantics<parallel>], iteration_bounds = array<i64: 1>, scalar_prefetch = 0 : i64, scratch_operands = 0 : i64, tpu.core_type = #tpu.core_type<tc>, window_params = [{transform_indices = @transform_0, window_bounds = array<i64: 8, 16>}, {pipeline_mode = #tpu.pipeline_mode<synchronous>, transform_indices = @transform_1, window_bounds = array<i64: 16, 128>}, {pipeline_mode = #tpu.pipeline_mode<synchronous>, transform_indices = @transform_2, window_bounds = array<i64: 1, 128>}, {pipeline_mode = #tpu.pipeline_mode<synchronous>, transform_indices = @transform_3, window_bounds = array<i64: 128, 128>}, {pipeline_mode = #tpu.pipeline_mode<synchronous>, transform_indices = @transform_4, window_bounds = array<i64: 1, 128>}, {transform_indices = @transform_5, window_bounds = array<i64: 8, 512>}, {pipeline_mode = #tpu.pipeline_mode<synchronous>, transform_indices = @transform_6, window_bounds = array<i64: 512, 256>}, {pipeline_mode = #tpu.pipeline_mode<synchronous>, transform_indices = @transform_7, window_bounds = array<i64: 1, 256>}, {transform_indices = @transform_8, window_bounds = array<i64: 8, 1024>}, {pipeline_mode = #tpu.pipeline_mode<synchronous>, transform_indices = @transform_9, window_bounds = array<i64: 1024, 256>}, {pipeline_mode = #tpu.pipeline_mode<synchronous>, transform_indices = @transform_10, window_bounds = array<i64: 1, 256>}, {transform_indices = @transform_11, window_bounds = array<i64: 8, 256>}]} {
    %c0 = arith.constant 0 : index
    %c0_0 = arith.constant 0 : index
    %0 = vector.load %arg1[%c0, %c0_0] : memref<8x16xf32, #tpu.memory_space<vmem>>, vector<8x16xf32>
    %c0_1 = arith.constant 0 : index
    %c0_2 = arith.constant 0 : index
    %1 = vector.load %arg2[%c0_1, %c0_2] : memref<16x128xf32, #tpu.memory_space<vmem>>, vector<16x128xf32>
    %cst = arith.constant dense<0.000000e+00> : vector<8x128xf32>
    %2 = tpu.matmul %0, %1, %cst {dimension_numbers = #tpu.dot_dimension_numbers<[1], [0], [0], [1], [0, 0, 1, 1], [], []>} : vector<8x16xf32>, vector<16x128xf32>, vector<8x128xf32> -> vector<8x128xf32>
    %c0_3 = arith.constant 0 : index
    %c0_4 = arith.constant 0 : index
    %3 = vector.load %arg3[%c0_3, %c0_4] : memref<1x128xf32, #tpu.memory_space<vmem>>, vector<1x128xf32>
    %4 = vector.broadcast %3 : vector<1x128xf32> to vector<8x128xf32>
    %5 = arith.addf %2, %4 : vector<8x128xf32>
    %cst_5 = arith.constant 0.000000e+00 : f32
    %6 = vector.broadcast %cst_5 : f32 to vector<8x128xf32>
    %7 = arith.maximumf %5, %6 : vector<8x128xf32>
    %c0_6 = arith.constant 0 : index
    %c0_7 = arith.constant 0 : index
    %8 = vector.load %arg4[%c0_6, %c0_7] : memref<128x128xf32, #tpu.memory_space<vmem>>, vector<128x128xf32>
    %cst_8 = arith.constant dense<0.000000e+00> : vector<8x128xf32>
    %9 = tpu.matmul %7, %8, %cst_8 {dimension_numbers = #tpu.dot_dimension_numbers<[1], [0], [0], [1], [0, 0, 1, 1], [], []>} : vector<8x128xf32>, vector<128x128xf32>, vector<8x128xf32> -> vector<8x128xf32>
    %c0_9 = arith.constant 0 : index
    %c0_10 = arith.constant 0 : index
    %10 = vector.load %arg5[%c0_9, %c0_10] : memref<1x128xf32, #tpu.memory_space<vmem>>, vector<1x128xf32>
    %11 = vector.broadcast %10 : vector<1x128xf32> to vector<8x128xf32>
    %12 = arith.addf %9, %11 : vector<8x128xf32>
    %cst_11 = arith.constant 0.000000e+00 : f32
    %13 = vector.broadcast %cst_11 : f32 to vector<8x128xf32>
    %14 = arith.maximumf %12, %13 : vector<8x128xf32>
    %15 = tpu.concatenate %14, %14, %14, %14 in 1 : vector<8x128xf32>, vector<8x128xf32>, vector<8x128xf32>, vector<8x128xf32> -> vector<8x512xf32>
    %16 = arith.truncf %15 : vector<8x512xf32> to vector<8x512xbf16>
    %c0_12 = arith.constant 0 : index
    %c0_13 = arith.constant 0 : index
    %17 = vector.load %arg6[%c0_12, %c0_13] : memref<8x512xbf16, #tpu.memory_space<vmem>>, vector<8x512xbf16>
    %18 = arith.mulf %16, %17 : vector<8x512xbf16>
    %c0_14 = arith.constant 0 : index
    %c0_15 = arith.constant 0 : index
    %19 = vector.load %arg7[%c0_14, %c0_15] : memref<512x256xbf16, #tpu.memory_space<vmem>>, vector<512x256xbf16>
    %cst_16 = arith.constant dense<0.000000e+00> : vector<8x256xf32>
    %20 = tpu.matmul %18, %19, %cst_16 {dimension_numbers = #tpu.dot_dimension_numbers<[1], [0], [0], [1], [0, 0, 1, 1], [], []>} : vector<8x512xbf16>, vector<512x256xbf16>, vector<8x256xf32> -> vector<8x256xf32>
    %c0_17 = arith.constant 0 : index
    %c0_18 = arith.constant 0 : index
    %21 = vector.load %arg8[%c0_17, %c0_18] : memref<1x256xf32, #tpu.memory_space<vmem>>, vector<1x256xf32>
    %22 = vector.broadcast %21 : vector<1x256xf32> to vector<8x256xf32>
    %23 = arith.addf %20, %22 : vector<8x256xf32>
    %cst_19 = arith.constant 0.000000e+00 : f32
    %24 = vector.broadcast %cst_19 : f32 to vector<8x256xf32>
    %25 = arith.maximumf %23, %24 : vector<8x256xf32>
    %26 = tpu.concatenate %25, %25, %25, %25 in 1 : vector<8x256xf32>, vector<8x256xf32>, vector<8x256xf32>, vector<8x256xf32> -> vector<8x1024xf32>
    %27 = arith.truncf %26 : vector<8x1024xf32> to vector<8x1024xbf16>
    %c0_20 = arith.constant 0 : index
    %c0_21 = arith.constant 0 : index
    %28 = vector.load %arg9[%c0_20, %c0_21] : memref<8x1024xbf16, #tpu.memory_space<vmem>>, vector<8x1024xbf16>
    %29 = arith.mulf %27, %28 : vector<8x1024xbf16>
    %c0_22 = arith.constant 0 : index
    %c0_23 = arith.constant 0 : index
    %30 = vector.load %arg10[%c0_22, %c0_23] : memref<1024x256xbf16, #tpu.memory_space<vmem>>, vector<1024x256xbf16>
    %cst_24 = arith.constant dense<0.000000e+00> : vector<8x256xf32>
    %31 = tpu.matmul %29, %30, %cst_24 {dimension_numbers = #tpu.dot_dimension_numbers<[1], [0], [0], [1], [0, 0, 1, 1], [], []>} : vector<8x1024xbf16>, vector<1024x256xbf16>, vector<8x256xf32> -> vector<8x256xf32>
    %c0_25 = arith.constant 0 : index
    %c0_26 = arith.constant 0 : index
    %32 = vector.load %arg11[%c0_25, %c0_26] : memref<1x256xf32, #tpu.memory_space<vmem>>, vector<1x256xf32>
    %33 = vector.broadcast %32 : vector<1x256xf32> to vector<8x256xf32>
    %34 = arith.addf %31, %33 : vector<8x256xf32>
    %c0_27 = arith.constant 0 : index
    %c0_28 = arith.constant 0 : index
    %35 = vector.load %arg12[%c0_27, %c0_28] : memref<8x256xf32, #tpu.memory_space<vmem>>, vector<8x256xf32>
    tpu.vector_store %arg12[%c0_27, %c0_28], %34 {strides = array<i32>} : memref<8x256xf32, #tpu.memory_space<vmem>>, vector<8x256xf32>,
    return
  }
  func.func @transform_0(%arg0: i32) -> (i32, i32) {
    %c0_i32 = arith.constant 0 : i32
    %c0_i32_0 = arith.constant 0 : i32
    return %arg0, %c0_i32 : i32, i32
  }
  func.func @transform_1(%arg0: i32) -> (i32, i32) {
    %c0_i32 = arith.constant 0 : i32
    %c0_i32_0 = arith.constant 0 : i32
    %c0_i32_1 = arith.constant 0 : i32
    return %c0_i32, %c0_i32_0 : i32, i32
  }
  func.func @transform_2(%arg0: i32) -> (i32, i32) {
    %c0_i32 = arith.constant 0 : i32
    %c0_i32_0 = arith.constant 0 : i32
    %c0_i32_1 = arith.constant 0 : i32
    return %c0_i32, %c0_i32_0 : i32, i32
  }
  func.func @transform_3(%arg0: i32) -> (i32, i32) {
    %c0_i32 = arith.constant 0 : i32
    %c0_i32_0 = arith.constant 0 : i32
    %c0_i32_1 = arith.constant 0 : i32
    return %c0_i32, %c0_i32_0 : i32, i32
  }
  func.func @transform_4(%arg0: i32) -> (i32, i32) {
    %c0_i32 = arith.constant 0 : i32
    %c0_i32_0 = arith.constant 0 : i32
    %c0_i32_1 = arith.constant 0 : i32
    return %c0_i32, %c0_i32_0 : i32, i32
  }
  func.func @transform_5(%arg0: i32) -> (i32, i32) {
    %c0_i32 = arith.constant 0 : i32
    %c0_i32_0 = arith.constant 0 : i32
    return %arg0, %c0_i32 : i32, i32
  }
  func.func @transform_6(%arg0: i32) -> (i32, i32) {
    %c0_i32 = arith.constant 0 : i32
    %c0_i32_0 = arith.constant 0 : i32
    %c0_i32_1 = arith.constant 0 : i32
    return %c0_i32, %c0_i32_0 : i32, i32
  }
  func.func @transform_7(%arg0: i32) -> (i32, i32) {
    %c0_i32 = arith.constant 0 : i32
    %c0_i32_0 = arith.constant 0 : i32
    %c0_i32_1 = arith.constant 0 : i32
    return %c0_i32, %c0_i32_0 : i32, i32
  }
  func.func @transform_8(%arg0: i32) -> (i32, i32) {
    %c0_i32 = arith.constant 0 : i32
    %c0_i32_0 = arith.constant 0 : i32
    return %arg0, %c0_i32 : i32, i32
  }
  func.func @transform_9(%arg0: i32) -> (i32, i32) {
    %c0_i32 = arith.constant 0 : i32
    %c0_i32_0 = arith.constant 0 : i32
    %c0_i32_1 = arith.constant 0 : i32
    return %c0_i32, %c0_i32_0 : i32, i32
  }
  func.func @transform_10(%arg0: i32) -> (i32, i32) {
    %c0_i32 = arith.constant 0 : i32
    %c0_i32_0 = arith.constant 0 : i32
    %c0_i32_1 = arith.constant 0 : i32
    return %c0_i32, %c0_i32_0 : i32, i32
  }
  func.func @transform_11(%arg0: i32) -> (i32, i32) {
    %c0_i32 = arith.constant 0 : i32
    %c0_i32_0 = arith.constant 0 : i32
    return %arg0, %c0_i32 : i32, i32
  }
}

</mosaic_0001>

<llo_original>
// kernel: tpu_custom_call.1
$region0: #{tpu_custom_call.1}
  #allocation0 [shape = 'u32[]', space=smem, size = 0x4, offset = 0x4, fixed_abs, tag = 'smem constant byte address 0x4 - core index']
  #allocation1 [shape = 'u32[144,128]{1,0:T(1,128)}', space=vmem, size = 0x12000, scoped, tag = 'internal scratch']
  %s0 = inlined_call_operand.hbm [shape: f32[8,16], index: 0, kind: input, shape index: {}]
  %s1 = inlined_call_operand.hbm [shape: f32[16,128], index: 1, kind: input, shape index: {}]
  %s2 = inlined_call_operand.vmem [shape: f32[1,128], index: 2, kind: input, shape index: {}]
  %s3 = inlined_call_operand.hbm [shape: f32[128,128], index: 3, kind: input, shape index: {}]
  %s4 = inlined_call_operand.vmem [shape: f32[1,128], index: 4, kind: input, shape index: {}]
  %s5 = inlined_call_operand.hbm [shape: bf16[8,512], index: 5, kind: input, shape index: {}]
  %s6 = inlined_call_operand.hbm [shape: bf16[512,256], index: 6, kind: input, shape index: {}]
  %s7 = inlined_call_operand.vmem [shape: f32[1,256], index: 7, kind: input, shape index: {}]
  %s8 = inlined_call_operand.hbm [shape: bf16[8,1024], index: 8, kind: input, shape index: {}]
  %s9 = inlined_call_operand.hbm [shape: bf16[1024,256], index: 9, kind: input, shape index: {}]
  %s10 = inlined_call_operand.vmem [shape: f32[1,256], index: 10, kind: input, shape index: {}]
  %s11 = inlined_call_operand.hbm [shape: f32[8,256], index: 11, kind: output, shape index: {}]
  %s12 = sld [smem:[#allocation0]]
  $region82: #{tpu_custom_call.1} parent=0
    _
  %s14 = ssub.s32 1, %s12
  %s15 = scalar_select 0, %s14, %s12
  $region1: #{tpu_custom_call.1} parent=0
    #allocation2 [shape = 'u8[4096]{0}', space=vmem, size = 0x1000, scoped, tag = 'input window, operand 0, single buffered']
    #allocation3 [shape = 's32[1]{0}', space=sflag, size = 0x4, scoped, tag = 'scoped memory for tpu_custom_call.1']
    #allocation4 [shape = 's32[1]{0}', space=sflag, size = 0x4, scoped, tag = 'scoped memory for tpu_custom_call.1']
    #allocation5 [shape = 'u8[8192]{0}', space=vmem, size = 0x2000, scoped, tag = 'input window, operand 1, single buffered']
    #allocation6 [shape = 's32[1]{0}', space=sflag, size = 0x4, scoped, tag = 'scoped memory for tpu_custom_call.1']
    #allocation7 [shape = 'u8[65536]{0}', space=vmem, size = 0x10000, scoped, tag = 'input window, operand 3, single buffered']
    #allocation8 [shape = 'u8[8192]{0}', space=vmem, size = 0x2000, scoped, tag = 'input window, operand 5, single buffered']
    #allocation9 [shape = 's32[1]{0}', space=sflag, size = 0x4, scoped, tag = 'scoped memory for tpu_custom_call.1']
    #allocation10 [shape = 'u8[262144]{0}', space=vmem, size = 0x40000, scoped, tag = 'input window, operand 6, single buffered']
    #allocation11 [shape = 'u8[16384]{0}', space=vmem, size = 0x4000, scoped, tag = 'input window, operand 8, single buffered']
    #allocation12 [shape = 's32[1]{0}', space=sflag, size = 0x4, scoped, tag = 'scoped memory for tpu_custom_call.1']
    #allocation13 [shape = 'u8[524288]{0}', space=vmem, size = 0x80000, scoped, tag = 'input window, operand 9, single buffered']
    #allocation14 [shape = 'u8[8192]{0}', space=vmem, size = 0x2000, scoped, tag = 'output window, operand 0, single buffered']
    %16 = vsyncpa [#allocation3], 0
    %17 = vsyncpa [#allocation6], 0
    %18 = vsyncpa [#allocation9], 0
    %19 = vsyncpa [#allocation12], 0
    %20 = vsyncpa [#allocation4], 0
    // Predicated region
    $region2: #{tpu_custom_call.1} parent=1 // pred_check
      _
    $region3: #{tpu_custom_call.1} parent=1 // pred_check_branch
      %22 = sbr.rel (0) target = $region5
    $region4: #{tpu_custom_call.1} parent=1 // pred_region
      %s24 = ssub.s32 128, 128
      %25 = vsyncadd [#allocation3], %s24
      %s27 = sshll.u32 [#allocation2], 4
      %s28 = int_to_ptr.vmem [resolvable:$true] %s27
      %30 = dma.hbm_to_vmem [thread:$0]  %s0, 128, %s28, [#allocation3]
    $region5: #{tpu_custom_call.1} parent=1 // pred_fallthru
      _
    // Predicated region
    $region6: #{tpu_custom_call.1} parent=1 // pred_check
      _
    $region7: #{tpu_custom_call.1} parent=1 // pred_check_branch
      %32 = sbr.rel (0) target = $region9
    $region8: #{tpu_custom_call.1} parent=1 // pred_region
      %s34 = ssub.s32 256, 256
      %35 = vsyncadd [#allocation6], %s34
      %s36 = sshll.u32 [#allocation5], 4
      %s37 = int_to_ptr.vmem [resolvable:$true] %s36
      %42 = dma.hbm_to_vmem [thread:$0]  %s1, 256, %s37, [#allocation6], 128, 128, 8
    $region9: #{tpu_custom_call.1} parent=1 // pred_fallthru
      _
    // Predicated region
    $region10: #{tpu_custom_call.1} parent=1 // pred_check
      _
    $region11: #{tpu_custom_call.1} parent=1 // pred_check_branch
      %44 = sbr.rel (0) target = $region13
    $region12: #{tpu_custom_call.1} parent=1 // pred_region
      _
    $region13: #{tpu_custom_call.1} parent=1 // pred_fallthru
      _
    // Predicated region
    $region14: #{tpu_custom_call.1} parent=1 // pred_check
      _
    $region15: #{tpu_custom_call.1} parent=1 // pred_check_branch
      %46 = sbr.rel (0) target = $region17
    $region16: #{tpu_custom_call.1} parent=1 // pred_region
      %s48 = ssub.s32 2048, 2048
      %49 = vsyncadd [#allocation6], %s48
      %s50 = sshll.u32 [#allocation7], 4
      %s51 = int_to_ptr.vmem [resolvable:$true] %s50
      %56 = dma.hbm_to_vmem [thread:$0]  %s3, 2048, %s51, [#allocation6], 128, 128, 8
    $region17: #{tpu_custom_call.1} parent=1 // pred_fallthru
      _
    // Predicated region
    $region18: #{tpu_custom_call.1} parent=1 // pred_check
      _
    $region19: #{tpu_custom_call.1} parent=1 // pred_check_branch
      %58 = sbr.rel (0) target = $region21
    $region20: #{tpu_custom_call.1} parent=1 // pred_region
      _
    $region21: #{tpu_custom_call.1} parent=1 // pred_fallthru
      _
    // Predicated region
    $region22: #{tpu_custom_call.1} parent=1 // pred_check
      _
    $region23: #{tpu_custom_call.1} parent=1 // pred_check_branch
      %60 = sbr.rel (0) target = $region25
    $region24: #{tpu_custom_call.1} parent=1 // pred_region
      %s62 = ssub.s32 256, 256
      %63 = vsyncadd [#allocation9], %s62
      %s65 = sshll.u32 [#allocation8], 4
      %s66 = int_to_ptr.vmem [resolvable:$true] %s65
      %68 = dma.hbm_to_vmem [thread:$0]  %s5, 256, %s66, [#allocation9]
    $region25: #{tpu_custom_call.1} parent=1 // pred_fallthru
      _
    // Predicated region
    $region26: #{tpu_custom_call.1} parent=1 // pred_check
      _
    $region27: #{tpu_custom_call.1} parent=1 // pred_check_branch
      %70 = sbr.rel (0) target = $region29
    $region28: #{tpu_custom_call.1} parent=1 // pred_region
      %s72 = ssub.s32 8192, 8192
      %73 = vsyncadd [#allocation9], %s72
      %s74 = sshll.u32 [#allocation10], 4
      %s75 = int_to_ptr.vmem [resolvable:$true] %s74
      %80 = dma.hbm_to_vmem [thread:$0]  %s6, 8192, %s75, [#allocation9], 128, 128, 8
    $region29: #{tpu_custom_call.1} parent=1 // pred_fallthru
      _
    // Predicated region
    $region30: #{tpu_custom_call.1} parent=1 // pred_check
      _
    $region31: #{tpu_custom_call.1} parent=1 // pred_check_branch
      %82 = sbr.rel (0) target = $region33
    $region32: #{tpu_custom_call.1} parent=1 // pred_region
      _
    $region33: #{tpu_custom_call.1} parent=1 // pred_fallthru
      _
    // Predicated region
    $region34: #{tpu_custom_call.1} parent=1 // pred_check
      _
    $region35: #{tpu_custom_call.1} parent=1 // pred_check_branch
      %84 = sbr.rel (0) target = $region37
    $region36: #{tpu_custom_call.1} parent=1 // pred_region
      %s86 = ssub.s32 512, 512
      %87 = vsyncadd [#allocation12], %s86
      %s89 = sshll.u32 [#allocation11], 4
      %s90 = int_to_ptr.vmem [resolvable:$true] %s89
      %92 = dma.hbm_to_vmem [thread:$0]  %s8, 512, %s90, [#allocation12]
    $region37: #{tpu_custom_call.1} parent=1 // pred_fallthru
      _
    // Predicated region
    $region38: #{tpu_custom_call.1} parent=1 // pred_check
      _
    $region39: #{tpu_custom_call.1} parent=1 // pred_check_branch
      %94 = sbr.rel (0) target = $region41
    $region40: #{tpu_custom_call.1} parent=1 // pred_region
      %s96 = ssub.s32 16384, 16384
      %97 = vsyncadd [#allocation12], %s96
      %s98 = sshll.u32 [#allocation13], 4
      %s99 = int_to_ptr.vmem [resolvable:$true] %s98
      %104 = dma.hbm_to_vmem [thread:$0]  %s9, 16384, %s99, [#allocation12], 128, 128, 8
    $region41: #{tpu_custom_call.1} parent=1 // pred_fallthru
      _
    // Predicated region
    $region42: #{tpu_custom_call.1} parent=1 // pred_check
      _
    $region43: #{tpu_custom_call.1} parent=1 // pred_check_branch
      %106 = sbr.rel (0) target = $region45
    $region44: #{tpu_custom_call.1} parent=1 // pred_region
      _
    $region45: #{tpu_custom_call.1} parent=1 // pred_fallthru
      _
    // Predicated region
    $region46: #{tpu_custom_call.1} parent=1 // pred_check
      _
    $region47: #{tpu_custom_call.1} parent=1 // pred_check_branch
      %108 = sbr.rel (0) target = $region49
    $region48: #{tpu_custom_call.1} parent=1 // pred_region
      %109 = dma.done [#allocation3], 128
    $region49: #{tpu_custom_call.1} parent=1 // pred_fallthru
      _
    // Predicated region
    $region50: #{tpu_custom_call.1} parent=1 // pred_check
      _
    $region51: #{tpu_custom_call.1} parent=1 // pred_check_branch
      %111 = sbr.rel (0) target = $region53
    $region52: #{tpu_custom_call.1} parent=1 // pred_region
      %112 = dma.done [#allocation6], 256
    $region53: #{tpu_custom_call.1} parent=1 // pred_fallthru
      _
    // Predicated region
    $region54: #{tpu_custom_call.1} parent=1 // pred_check
      _
    $region55: #{tpu_custom_call.1} parent=1 // pred_check_branch
      %114 = sbr.rel (0) target = $region57
    $region56: #{tpu_custom_call.1} parent=1 // pred_region
      %115 = dma.done [#allocation6], 2048
    $region57: #{tpu_custom_call.1} parent=1 // pred_fallthru
      _
    // Predicated region
    $region58: #{tpu_custom_call.1} parent=1 // pred_check
      _
    $region59: #{tpu_custom_call.1} parent=1 // pred_check_branch
      %117 = sbr.rel (0) target = $region61
    $region60: #{tpu_custom_call.1} parent=1 // pred_region
      %118 = dma.done [#allocation9], 256
    $region61: #{tpu_custom_call.1} parent=1 // pred_fallthru
      _
    // Predicated region
    $region62: #{tpu_custom_call.1} parent=1 // pred_check
      _
    $region63: #{tpu_custom_call.1} parent=1 // pred_check_branch
      %120 = sbr.rel (0) target = $region65
    $region64: #{tpu_custom_call.1} parent=1 // pred_region
      %121 = dma.done [#allocation9], 8192
    $region65: #{tpu_custom_call.1} parent=1 // pred_fallthru
      _
    // Predicated region
    $region66: #{tpu_custom_call.1} parent=1 // pred_check
      _
    $region67: #{tpu_custom_call.1} parent=1 // pred_check_branch
      %123 = sbr.rel (0) target = $region69
    $region68: #{tpu_custom_call.1} parent=1 // pred_region
      %124 = dma.done [#allocation12], 512
    $region69: #{tpu_custom_call.1} parent=1 // pred_fallthru
      _
    // Predicated region
    $region70: #{tpu_custom_call.1} parent=1 // pred_check
      _
    $region71: #{tpu_custom_call.1} parent=1 // pred_check_branch
      %126 = sbr.rel (0) target = $region73
    $region72: #{tpu_custom_call.1} parent=1 // pred_region
      %127 = dma.done [#allocation12], 16384
    $region73: #{tpu_custom_call.1} parent=1 // pred_fallthru
      _
    %v128 = vld [vmem:[#allocation2] sm:$0xff]
    %v129 = vld [vmem:[#allocation5] sm:$0xff]
    %v130 = vld [vmem:[#allocation5 + $0x8] sm:$0xff]
    %v131 = vld [vmem:[%s2] sm:$0x1]
    %v133 = vlaneseq
    %v134 = vshrl.u32 %v133, 7
    %v135 = vsub.s32 0, %v134
    %v136 = vrot.slane %v131, %v135
    %vm138 = vcmask 130048
    %v140 = vsel %vm138, %v128, 0
    %142 = vmatprep.subr.mxu0 0.0
    %143 = vmatpush1.msra.mxu0 0.0
    %144 = vmatprep.subr.mxu0 0.0
    %145 = vmatpush1.msra.mxu0 0.0
    %146 = vmatprep.subr.mxu0 0.0
    %147 = vmatpush1.msra.mxu0 0.0
    %148 = vmatprep.subr.mxu0 0.0
    %149 = vmatpush1.msra.mxu0 0.0
    %150 = vmatprep.subr.mxu0 0.0
    %151 = vmatpush1.msra.mxu0 0.0
    %152 = vmatprep.subr.mxu0 0.0
    %153 = vmatpush1.msra.mxu0 0.0
    %154 = vmatprep.subr.mxu0 0.0
    %155 = vmatpush1.msra.mxu0 0.0
    %156 = vmatprep.subr.mxu0 0.0
    %157 = vmatpush1.msra.mxu0 0.0
    %158 = vmatprep.subr.mxu0 0.0
    %159 = vmatpush1.msra.mxu0 0.0
    %160 = vmatprep.subr.mxu0 0.0
    %161 = vmatpush1.msra.mxu0 0.0
    %162 = vmatprep.subr.mxu0 0.0
    %163 = vmatpush1.msra.mxu0 0.0
    %164 = vmatprep.subr.mxu0 0.0
    %165 = vmatpush1.msra.mxu0 0.0
    %166 = vmatprep.subr.mxu0 0.0
    %167 = vmatpush1.msra.mxu0 0.0
    %168 = vmatprep.subr.mxu0 0.0
    %169 = vmatpush1.msra.mxu0 0.0
    %170 = vmatprep.subr.mxu0 0.0
    %171 = vmatpush1.msra.mxu0 %v130
    %172 = vmatprep.subr.mxu0 0.0
    %173 = vmatpush1.msra.mxu0 %v129
    %174 = vmatprep.subr.mxu0 0.0
    %175 = vmatpush2.msra.mxu0 0.0
    %176 = vmatprep.subr.mxu0 0.0
    %177 = vmatpush2.msra.mxu0 0.0
    %178 = vmatprep.subr.mxu0 0.0
    %179 = vmatpush2.msra.mxu0 0.0
    %180 = vmatprep.subr.mxu0 0.0
    %181 = vmatpush2.msra.mxu0 0.0
    %182 = vmatprep.subr.mxu0 0.0
    %183 = vmatpush2.msra.mxu0 0.0
    %184 = vmatprep.subr.mxu0 0.0
    %185 = vmatpush2.msra.mxu0 0.0
    %186 = vmatprep.subr.mxu0 0.0
    %187 = vmatpush2.msra.mxu0 0.0
    %188 = vmatprep.subr.mxu0 0.0
    %189 = vmatpush2.msra.mxu0 0.0
    %190 = vmatprep.subr.mxu0 0.0
    %191 = vmatpush2.msra.mxu0 0.0
    %192 = vmatprep.subr.mxu0 0.0
    %193 = vmatpush2.msra.mxu0 0.0
    %194 = vmatprep.subr.mxu0 0.0
    %195 = vmatpush2.msra.mxu0 0.0
    %196 = vmatprep.subr.mxu0 0.0
    %197 = vmatpush2.msra.mxu0 0.0
    %198 = vmatprep.subr.mxu0 0.0
    %199 = vmatpush2.msra.mxu0 0.0
    %200 = vmatprep.subr.mxu0 0.0
    %201 = vmatpush2.msra.mxu0 0.0
    %202 = vmatprep.subr.mxu0 0.0
    %203 = vmatpush2.msra.mxu0 0.0
    %204 = vmatprep.subr.mxu0 0.0
    %205 = vmatpush2.msra.mxu0 0.0
    %206 = vmatprep.mubr.f32.mxu0 0.0
    %207 = vmatmul.mubr.f32.gmra.mxu0 %v140
    %v208 = vpop.f32.mrf.mxu0
    %v209 = vadd.f32 %v136, %v208
    %v210 = vpop.f32.mrf.mxu0
    %211 = vdwg.mxu0
    %v212 = vmax.f32 %v209, 0.0
    %v213 = vld [vmem:[#allocation7] sm:$0xff]
    %v214 = vld [vmem:[#allocation7 + $0x8] sm:$0xff]
    %v215 = vld [vmem:[#allocation7 + $0x10] sm:$0xff]
    %v216 = vld [vmem:[#allocation7 + $0x18] sm:$0xff]
    %v217 = vld [vmem:[#allocation7 + $0x20] sm:$0xff]
    %v218 = vld [vmem:[#allocation7 + $0x28] sm:$0xff]
    %v219 = vld [vmem:[#allocation7 + $0x30] sm:$0xff]
    %v220 = vld [vmem:[#allocation7 + $0x38] sm:$0xff]
    %v221 = vld [vmem:[#allocation7 + $0x40] sm:$0xff]
    %v222 = vld [vmem:[#allocation7 + $0x48] sm:$0xff]
    %v223 = vld [vmem:[#allocation7 + $0x50] sm:$0xff]
    %v224 = vld [vmem:[#allocation7 + $0x58] sm:$0xff]
    %v225 = vld [vmem:[#allocation7 + $0x60] sm:$0xff]
    %v226 = vld [vmem:[#allocation7 + $0x68] sm:$0xff]
    %v227 = vld [vmem:[#allocation7 + $0x70] sm:$0xff]
    %v228 = vld [vmem:[#allocation7 + $0x78] sm:$0xff]
    %v229 = vld [vmem:[%s4] sm:$0x1]
    %v231 = vlaneseq
    %v232 = vshrl.u32 %v231, 7
    %v233 = vsub.s32 0, %v232
    %v234 = vrot.slane %v229, %v233
    %236 = vmatprep.subr.mxu0 0.0
    %237 = vmatpush1.msra.mxu0 %v228
    %238 = vmatprep.subr.mxu0 0.0
    %239 = vmatpush1.msra.mxu0 %v227
    %240 = vmatprep.subr.mxu0 0.0
    %241 = vmatpush1.msra.mxu0 %v226
    %242 = vmatprep.subr.mxu0 0.0
    %243 = vmatpush1.msra.mxu0 %v225
    %244 = vmatprep.subr.mxu0 0.0
    %245 = vmatpush1.msra.mxu0 %v224
    %246 = vmatprep.subr.mxu0 0.0
    %247 = vmatpush1.msra.mxu0 %v223
    %248 = vmatprep.subr.mxu0 0.0
    %249 = vmatpush1.msra.mxu0 %v222
    %250 = vmatprep.subr.mxu0 0.0
    %251 = vmatpush1.msra.mxu0 %v221
    %252 = vmatprep.subr.mxu0 0.0
    %253 = vmatpush1.msra.mxu0 %v220
    %254 = vmatprep.subr.mxu0 0.0
    %255 = vmatpush1.msra.mxu0 %v219
    %256 = vmatprep.subr.mxu0 0.0
    %257 = vmatpush1.msra.mxu0 %v218
    %258 = vmatprep.subr.mxu0 0.0
    %259 = vmatpush1.msra.mxu0 %v217
    %260 = vmatprep.subr.mxu0 0.0
    %261 = vmatpush1.msra.mxu0 %v216
    %262 = vmatprep.subr.mxu0 0.0
    %263 = vmatpush1.msra.mxu0 %v215
    %264 = vmatprep.subr.mxu0 0.0
    %265 = vmatpush1.msra.mxu0 %v214
    %266 = vmatprep.subr.mxu0 0.0
    %267 = vmatpush1.msra.mxu0 %v213
    %268 = vmatprep.subr.mxu0 0.0
    %269 = vmatpush2.msra.mxu0 0.0
    %270 = vmatprep.subr.mxu0 0.0
    %271 = vmatpush2.msra.mxu0 0.0
    %272 = vmatprep.subr.mxu0 0.0
    %273 = vmatpush2.msra.mxu0 0.0
    %274 = vmatprep.subr.mxu0 0.0
    %275 = vmatpush2.msra.mxu0 0.0
    %276 = vmatprep.subr.mxu0 0.0
    %277 = vmatpush2.msra.mxu0 0.0
    %278 = vmatprep.subr.mxu0 0.0
    %279 = vmatpush2.msra.mxu0 0.0
    %280 = vmatprep.subr.mxu0 0.0
    %281 = vmatpush2.msra.mxu0 0.0
    %282 = vmatprep.subr.mxu0 0.0
    %283 = vmatpush2.msra.mxu0 0.0
    %284 = vmatprep.subr.mxu0 0.0
    %285 = vmatpush2.msra.mxu0 0.0
    %286 = vmatprep.subr.mxu0 0.0
    %287 = vmatpush2.msra.mxu0 0.0
    %288 = vmatprep.subr.mxu0 0.0
    %289 = vmatpush2.msra.mxu0 0.0
    %290 = vmatprep.subr.mxu0 0.0
    %291 = vmatpush2.msra.mxu0 0.0
    %292 = vmatprep.subr.mxu0 0.0
    %293 = vmatpush2.msra.mxu0 0.0
    %294 = vmatprep.subr.mxu0 0.0
    %295 = vmatpush2.msra.mxu0 0.0
    %296 = vmatprep.subr.mxu0 0.0
    %297 = vmatpush2.msra.mxu0 0.0
    %298 = vmatprep.subr.mxu0 0.0
    %299 = vmatpush2.msra.mxu0 0.0
    %300 = vmatprep.mubr.f32.mxu0 0.0
    %301 = vmatmul.mubr.f32.gmra.mxu0 %v212
    %v302 = vpop.f32.mrf.mxu0
    %v303 = vadd.f32 %v234, %v302
    %v304 = vpop.f32.mrf.mxu0
    %305 = vdwg.mxu0
    %v306 = vmax.f32 %v303, 0.0
    %v307 = vpack.c.bf16 %v306, %v306
    %v308 = vld [vmem:[#allocation8] sm:$0xff]
    %v309 = vld [vmem:[#allocation8 + $0x8] sm:$0xff]
    %v312 = vunpack.c.l.b16 %v308
    %v313 = vunpack.c.h.b16 %v308
    %v314 = vunpack.c.l.b16 %v309
    %v315 = vunpack.c.h.b16 %v309
    %v316 = vpack.c.b16 %v312, %v312
    %v317 = vpack.c.b16 %v313, %v313
    %v318 = vpack.c.b16 %v314, %v314
    %v319 = vpack.c.b16 %v315, %v315
    %v324 = vmul.bf16 %v307, %v316
    %v325 = vmul.bf16 %v307, %v317
    %v326 = vmul.bf16 %v307, %v318
    %v327 = vmul.bf16 %v307, %v319
    %v328 = vld [vmem:[#allocation10] sm:$0xff]
    %v329 = vld [vmem:[#allocation10 + $0x8] sm:$0xff]
    %v330 = vld [vmem:[#allocation10 + $0x10] sm:$0xff]
    %v331 = vld [vmem:[#allocation10 + $0x18] sm:$0xff]
    %v332 = vld [vmem:[#allocation10 + $0x20] sm:$0xff]
    %v333 = vld [vmem:[#allocation10 + $0x28] sm:$0xff]
    %v334 = vld [vmem:[#allocation10 + $0x30] sm:$0xff]
    %v335 = vld [vmem:[#allocation10 + $0x38] sm:$0xff]
    %v336 = vld [vmem:[#allocation10 + $0x40] sm:$0xff]
    %v337 = vld [vmem:[#allocation10 + $0x48] sm:$0xff]
    %v338 = vld [vmem:[#allocation10 + $0x50] sm:$0xff]
    %v339 = vld [vmem:[#allocation10 + $0x58] sm:$0xff]
    %v340 = vld [vmem:[#allocation10 + $0x60] sm:$0xff]
    %v341 = vld [vmem:[#allocation10 + $0x68] sm:$0xff]
    %v342 = vld [vmem:[#allocation10 + $0x70] sm:$0xff]
    %v343 = vld [vmem:[#allocation10 + $0x78] sm:$0xff]
    %v344 = vld [vmem:[#allocation10 + $0x80] sm:$0xff]
    %v345 = vld [vmem:[#allocation10 + $0x88] sm:$0xff]
    %v346 = vld [vmem:[#allocation10 + $0x90] sm:$0xff]
    %v347 = vld [vmem:[#allocation10 + $0x98] sm:$0xff]
    %v348 = vld [vmem:[#allocation10 + $0xa0] sm:$0xff]
    %v349 = vld [vmem:[#allocation10 + $0xa8] sm:$0xff]
    %v350 = vld [vmem:[#allocation10 + $0xb0] sm:$0xff]
    %v351 = vld [vmem:[#allocation10 + $0xb8] sm:$0xff]
    %v352 = vld [vmem:[#allocation10 + $0xc0] sm:$0xff]
    %v353 = vld [vmem:[#allocation10 + $0xc8] sm:$0xff]
    %v354 = vld [vmem:[#allocation10 + $0xd0] sm:$0xff]
    %v355 = vld [vmem:[#allocation10 + $0xd8] sm:$0xff]
    %v356 = vld [vmem:[#allocation10 + $0xe0] sm:$0xff]
    %v357 = vld [vmem:[#allocation10 + $0xe8] sm:$0xff]
    %v358 = vld [vmem:[#allocation10 + $0xf0] sm:$0xff]
    %v359 = vld [vmem:[#allocation10 + $0xf8] sm:$0xff]
    %v360 = vld [vmem:[#allocation10 + $0x100] sm:$0xff]
    %v361 = vld [vmem:[#allocation10 + $0x108] sm:$0xff]
    %v362 = vld [vmem:[#allocation10 + $0x110] sm:$0xff]
    %v363 = vld [vmem:[#allocation10 + $0x118] sm:$0xff]
    %v364 = vld [vmem:[#allocation10 + $0x120] sm:$0xff]
    %v365 = vld [vmem:[#allocation10 + $0x128] sm:$0xff]
    %v366 = vld [vmem:[#allocation10 + $0x130] sm:$0xff]
    %v367 = vld [vmem:[#allocation10 + $0x138] sm:$0xff]
    %v368 = vld [vmem:[#allocation10 + $0x140] sm:$0xff]
    %v369 = vld [vmem:[#allocation10 + $0x148] sm:$0xff]
    %v370 = vld [vmem:[#allocation10 + $0x150] sm:$0xff]
    %v371 = vld [vmem:[#allocation10 + $0x158] sm:$0xff]
    %v372 = vld [vmem:[#allocation10 + $0x160] sm:$0xff]
    %v373 = vld [vmem:[#allocation10 + $0x168] sm:$0xff]
    %v374 = vld [vmem:[#allocation10 + $0x170] sm:$0xff]
    %v375 = vld [vmem:[#allocation10 + $0x178] sm:$0xff]
    %v376 = vld [vmem:[#allocation10 + $0x180] sm:$0xff]
    %v377 = vld [vmem:[#allocation10 + $0x188] sm:$0xff]
    %v378 = vld [vmem:[#allocation10 + $0x190] sm:$0xff]
    %v379 = vld [vmem:[#allocation10 + $0x198] sm:$0xff]
    %v380 = vld [vmem:[#allocation10 + $0x1a0] sm:$0xff]
    %v381 = vld [vmem:[#allocation10 + $0x1a8] sm:$0xff]
    %v382 = vld [vmem:[#allocation10 + $0x1b0] sm:$0xff]
    %v383 = vld [vmem:[#allocation10 + $0x1b8] sm:$0xff]
    %v384 = vld [vmem:[#allocation10 + $0x1c0] sm:$0xff]
    %v385 = vld [vmem:[#allocation10 + $0x1c8] sm:$0xff]
    %v386 = vld [vmem:[#allocation10 + $0x1d0] sm:$0xff]
    %v387 = vld [vmem:[#allocation10 + $0x1d8] sm:$0xff]
    %v388 = vld [vmem:[#allocation10 + $0x1e0] sm:$0xff]
    %v389 = vld [vmem:[#allocation10 + $0x1e8] sm:$0xff]
    %v390 = vld [vmem:[#allocation10 + $0x1f0] sm:$0xff]
    %v391 = vld [vmem:[#allocation10 + $0x1f8] sm:$0xff]
    %v392 = vld [vmem:[%s7] sm:$0x3]
    %v394 = vlaneseq
    %v395 = vshrl.u32 %v394, 7
    %v396 = vsub.s32 0, %v395
    %v397 = vrot.slane %v392, %v396
    %v398 = vlaneseq
    %v399 = vshrl.u32 %v398, 7
    %v400 = vsub.s32 1, %v399
    %v401 = vrot.slane %v392, %v400
    %v468 = vunpack.c.l.b16 %v328
    %v469 = vunpack.c.h.b16 %v328
    %v470 = vunpack.c.l.b16 %v329
    %v471 = vunpack.c.h.b16 %v329
    %v472 = vunpack.c.l.b16 %v330
    %v473 = vunpack.c.h.b16 %v330
    %v474 = vunpack.c.l.b16 %v331
    %v475 = vunpack.c.h.b16 %v331
    %v476 = vunpack.c.l.b16 %v332
    %v477 = vunpack.c.h.b16 %v332
    %v478 = vunpack.c.l.b16 %v333
    %v479 = vunpack.c.h.b16 %v333
    %v480 = vunpack.c.l.b16 %v334
    %v481 = vunpack.c.h.b16 %v334
    %v482 = vunpack.c.l.b16 %v335
    %v483 = vunpack.c.h.b16 %v335
    %v484 = vunpack.c.l.b16 %v336
    %v485 = vunpack.c.h.b16 %v336
    %v486 = vunpack.c.l.b16 %v337
    %v487 = vunpack.c.h.b16 %v337
    %v488 = vunpack.c.l.b16 %v338
    %v489 = vunpack.c.h.b16 %v338
    %v490 = vunpack.c.l.b16 %v339
    %v491 = vunpack.c.h.b16 %v339
    %v492 = vunpack.c.l.b16 %v340
    %v493 = vunpack.c.h.b16 %v340
    %v494 = vunpack.c.l.b16 %v341
    %v495 = vunpack.c.h.b16 %v341
    %v496 = vunpack.c.l.b16 %v342
    %v497 = vunpack.c.h.b16 %v342
    %v498 = vunpack.c.l.b16 %v343
    %v499 = vunpack.c.h.b16 %v343
    %v500 = vunpack.c.l.b16 %v344
    %v501 = vunpack.c.h.b16 %v344
    %v502 = vunpack.c.l.b16 %v345
    %v503 = vunpack.c.h.b16 %v345
    %v504 = vunpack.c.l.b16 %v346
    %v505 = vunpack.c.h.b16 %v346
    %v506 = vunpack.c.l.b16 %v347
    %v507 = vunpack.c.h.b16 %v347
    %v508 = vunpack.c.l.b16 %v348
    %v509 = vunpack.c.h.b16 %v348
    %v510 = vunpack.c.l.b16 %v349
    %v511 = vunpack.c.h.b16 %v349
    %v512 = vunpack.c.l.b16 %v350
    %v513 = vunpack.c.h.b16 %v350
    %v514 = vunpack.c.l.b16 %v351
    %v515 = vunpack.c.h.b16 %v351
    %v516 = vunpack.c.l.b16 %v352
    %v517 = vunpack.c.h.b16 %v352
    %v518 = vunpack.c.l.b16 %v353
    %v519 = vunpack.c.h.b16 %v353
    %v520 = vunpack.c.l.b16 %v354
    %v521 = vunpack.c.h.b16 %v354
    %v522 = vunpack.c.l.b16 %v355
    %v523 = vunpack.c.h.b16 %v355
    %v524 = vunpack.c.l.b16 %v356
    %v525 = vunpack.c.h.b16 %v356
    %v526 = vunpack.c.l.b16 %v357
    %v527 = vunpack.c.h.b16 %v357
    %v528 = vunpack.c.l.b16 %v358
    %v529 = vunpack.c.h.b16 %v358
    %v530 = vunpack.c.l.b16 %v359
    %v531 = vunpack.c.h.b16 %v359
    %v532 = vunpack.c.l.b16 %v360
    %v533 = vunpack.c.h.b16 %v360
    %v534 = vunpack.c.l.b16 %v361
    %v535 = vunpack.c.h.b16 %v361
    %v536 = vunpack.c.l.b16 %v362
    %v537 = vunpack.c.h.b16 %v362
    %v538 = vunpack.c.l.b16 %v363
    %v539 = vunpack.c.h.b16 %v363
    %v540 = vunpack.c.l.b16 %v364
    %v541 = vunpack.c.h.b16 %v364
    %v542 = vunpack.c.l.b16 %v365
    %v543 = vunpack.c.h.b16 %v365
    %v544 = vunpack.c.l.b16 %v366
    %v545 = vunpack.c.h.b16 %v366
    %v546 = vunpack.c.l.b16 %v367
    %v547 = vunpack.c.h.b16 %v367
    %v548 = vunpack.c.l.b16 %v368
    %v549 = vunpack.c.h.b16 %v368
    %v550 = vunpack.c.l.b16 %v369
    %v551 = vunpack.c.h.b16 %v369
    %v552 = vunpack.c.l.b16 %v370
    %v553 = vunpack.c.h.b16 %v370
    %v554 = vunpack.c.l.b16 %v371
    %v555 = vunpack.c.h.b16 %v371
    %v556 = vunpack.c.l.b16 %v372
    %v557 = vunpack.c.h.b16 %v372
    %v558 = vunpack.c.l.b16 %v373
    %v559 = vunpack.c.h.b16 %v373
    %v560 = vunpack.c.l.b16 %v374
    %v561 = vunpack.c.h.b16 %v374
    %v562 = vunpack.c.l.b16 %v375
    %v563 = vunpack.c.h.b16 %v375
    %v564 = vunpack.c.l.b16 %v376
    %v565 = vunpack.c.h.b16 %v376
    %v566 = vunpack.c.l.b16 %v377
    %v567 = vunpack.c.h.b16 %v377
    %v568 = vunpack.c.l.b16 %v378
    %v569 = vunpack.c.h.b16 %v378
    %v570 = vunpack.c.l.b16 %v379
    %v571 = vunpack.c.h.b16 %v379
    %v572 = vunpack.c.l.b16 %v380
    %v573 = vunpack.c.h.b16 %v380
    %v574 = vunpack.c.l.b16 %v381
    %v575 = vunpack.c.h.b16 %v381
    %v576 = vunpack.c.l.b16 %v382
    %v577 = vunpack.c.h.b16 %v382
    %v578 = vunpack.c.l.b16 %v383
    %v579 = vunpack.c.h.b16 %v383
    %v580 = vunpack.c.l.b16 %v384
    %v581 = vunpack.c.h.b16 %v384
    %v582 = vunpack.c.l.b16 %v385
    %v583 = vunpack.c.h.b16 %v385
    %v584 = vunpack.c.l.b16 %v386
    %v585 = vunpack.c.h.b16 %v386
    %v586 = vunpack.c.l.b16 %v387
    %v587 = vunpack.c.h.b16 %v387
    %v588 = vunpack.c.l.b16 %v388
    %v589 = vunpack.c.h.b16 %v388
    %v590 = vunpack.c.l.b16 %v389
    %v591 = vunpack.c.h.b16 %v389
    %v592 = vunpack.c.l.b16 %v390
    %v593 = vunpack.c.h.b16 %v390
    %v594 = vunpack.c.l.b16 %v391
    %v595 = vunpack.c.h.b16 %v391
    %v596 = vpack.c.b16 %v470, %v468
    %v597 = vpack.c.b16 %v471, %v469
    %v598 = vpack.c.b16 %v474, %v472
    %v599 = vpack.c.b16 %v475, %v473
    %v600 = vpack.c.b16 %v478, %v476
    %v601 = vpack.c.b16 %v479, %v477
    %v602 = vpack.c.b16 %v482, %v480
    %v603 = vpack.c.b16 %v483, %v481
    %v604 = vpack.c.b16 %v486, %v484
    %v605 = vpack.c.b16 %v487, %v485
    %v606 = vpack.c.b16 %v490, %v488
    %v607 = vpack.c.b16 %v491, %v489
    %v608 = vpack.c.b16 %v494, %v492
    %v609 = vpack.c.b16 %v495, %v493
    %v610 = vpack.c.b16 %v498, %v496
    %v611 = vpack.c.b16 %v499, %v497
    %v612 = vpack.c.b16 %v502, %v500
    %v613 = vpack.c.b16 %v503, %v501
    %v614 = vpack.c.b16 %v506, %v504
    %v615 = vpack.c.b16 %v507, %v505
    %v616 = vpack.c.b16 %v510, %v508
    %v617 = vpack.c.b16 %v511, %v509
    %v618 = vpack.c.b16 %v514, %v512
    %v619 = vpack.c.b16 %v515, %v513
    %v620 = vpack.c.b16 %v518, %v516
    %v621 = vpack.c.b16 %v519, %v517
    %v622 = vpack.c.b16 %v522, %v520
    %v623 = vpack.c.b16 %v523, %v521
    %v624 = vpack.c.b16 %v526, %v524
    %v625 = vpack.c.b16 %v527, %v525
    %v626 = vpack.c.b16 %v530, %v528
    %v627 = vpack.c.b16 %v531, %v529
    %v628 = vpack.c.b16 %v534, %v532
    %v629 = vpack.c.b16 %v535, %v533
    %v630 = vpack.c.b16 %v538, %v536
    %v631 = vpack.c.b16 %v539, %v537
    %v632 = vpack.c.b16 %v542, %v540
    %v633 = vpack.c.b16 %v543, %v541
    %v634 = vpack.c.b16 %v546, %v544
    %v635 = vpack.c.b16 %v547, %v545
    %v636 = vpack.c.b16 %v550, %v548
    %v637 = vpack.c.b16 %v551, %v549
    %v638 = vpack.c.b16 %v554, %v552
    %v639 = vpack.c.b16 %v555, %v553
    %v640 = vpack.c.b16 %v558, %v556
    %v641 = vpack.c.b16 %v559, %v557
    %v642 = vpack.c.b16 %v562, %v560
    %v643 = vpack.c.b16 %v563, %v561
    %v644 = vpack.c.b16 %v566, %v564
    %v645 = vpack.c.b16 %v567, %v565
    %v646 = vpack.c.b16 %v570, %v568
    %v647 = vpack.c.b16 %v571, %v569
    %v648 = vpack.c.b16 %v574, %v572
    %v649 = vpack.c.b16 %v575, %v573
    %v650 = vpack.c.b16 %v578, %v576
    %v651 = vpack.c.b16 %v579, %v577
    %v652 = vpack.c.b16 %v582, %v580
    %v653 = vpack.c.b16 %v583, %v581
    %v654 = vpack.c.b16 %v586, %v584
    %v655 = vpack.c.b16 %v587, %v585
    %v656 = vpack.c.b16 %v590, %v588
    %v657 = vpack.c.b16 %v591, %v589
    %v658 = vpack.c.b16 %v594, %v592
    %v659 = vpack.c.b16 %v595, %v593
    %724 = vmatprep.subr.bf16.mxu0 %v611
    %725 = vmatpush1.bf16.msra.mxu0 %v610
    %726 = vmatprep.subr.bf16.mxu0 %v609
    %727 = vmatpush1.bf16.msra.mxu0 %v608
    %728 = vmatprep.subr.bf16.mxu0 %v607
    %729 = vmatpush1.bf16.msra.mxu0 %v606
    %730 = vmatprep.subr.bf16.mxu0 %v605
    %731 = vmatpush1.bf16.msra.mxu0 %v604
    %732 = vmatprep.subr.bf16.mxu0 %v603
    %733 = vmatpush1.bf16.msra.mxu0 %v602
    %734 = vmatprep.subr.bf16.mxu0 %v601
    %735 = vmatpush1.bf16.msra.mxu0 %v600
    %736 = vmatprep.subr.bf16.mxu0 %v599
    %737 = vmatpush1.bf16.msra.mxu0 %v598
    %738 = vmatprep.subr.bf16.mxu0 %v597
    %739 = vmatpush1.bf16.msra.mxu0 %v596
    %740 = vmatprep.subr.bf16.mxu0 %v627
    %741 = vmatpush2.bf16.msra.mxu0 %v626
    %742 = vmatprep.subr.bf16.mxu0 %v625
    %743 = vmatpush2.bf16.msra.mxu0 %v624
    %744 = vmatprep.subr.bf16.mxu0 %v623
    %745 = vmatpush2.bf16.msra.mxu0 %v622
    %746 = vmatprep.subr.bf16.mxu0 %v621
    %747 = vmatpush2.bf16.msra.mxu0 %v620
    %748 = vmatprep.subr.bf16.mxu0 %v619
    %749 = vmatpush2.bf16.msra.mxu0 %v618
    %750 = vmatprep.subr.bf16.mxu0 %v617
    %751 = vmatpush2.bf16.msra.mxu0 %v616
    %752 = vmatprep.subr.bf16.mxu0 %v615
    %753 = vmatpush2.bf16.msra.mxu0 %v614
    %754 = vmatprep.subr.bf16.mxu0 %v613
    %755 = vmatpush2.bf16.msra.mxu0 %v612
    %756 = vmatprep.mubr.bf16.mxu0 %v325
    %757 = vmatmul.mubr.bf16.gmra.mxu0 %v324
    %v758 = vpop.f32.mrf.mxu0
    %v759 = vadd.f32 %v397, %v758
    %v760 = vpop.f32.mrf.mxu0
    %v761 = vadd.f32 %v401, %v760
    %v762 = vpop.f32.mrf.mxu0
    %v763 = vpop.f32.mrf.mxu0
    %764 = vdwg.mxu0
    %765 = vmatprep.subr.bf16.mxu0 %v643
    %766 = vmatpush1.bf16.msra.mxu0 %v642
    %767 = vmatprep.subr.bf16.mxu0 %v641
    %768 = vmatpush1.bf16.msra.mxu0 %v640
    %769 = vmatprep.subr.bf16.mxu0 %v639
    %770 = vmatpush1.bf16.msra.mxu0 %v638
    %771 = vmatprep.subr.bf16.mxu0 %v637
    %772 = vmatpush1.bf16.msra.mxu0 %v636
    %773 = vmatprep.subr.bf16.mxu0 %v635
    %774 = vmatpush1.bf16.msra.mxu0 %v634
    %775 = vmatprep.subr.bf16.mxu0 %v633
    %776 = vmatpush1.bf16.msra.mxu0 %v632
    %777 = vmatprep.subr.bf16.mxu0 %v631
    %778 = vmatpush1.bf16.msra.mxu0 %v630
    %779 = vmatprep.subr.bf16.mxu0 %v629
    %780 = vmatpush1.bf16.msra.mxu0 %v628
    %781 = vmatprep.subr.bf16.mxu0 %v659
    %782 = vmatpush2.bf16.msra.mxu0 %v658
    %783 = vmatprep.subr.bf16.mxu0 %v657
    %784 = vmatpush2.bf16.msra.mxu0 %v656
    %785 = vmatprep.subr.bf16.mxu0 %v655
    %786 = vmatpush2.bf16.msra.mxu0 %v654
    %787 = vmatprep.subr.bf16.mxu0 %v653
    %788 = vmatpush2.bf16.msra.mxu0 %v652
    %789 = vmatprep.subr.bf16.mxu0 %v651
    %790 = vmatpush2.bf16.msra.mxu0 %v650
    %791 = vmatprep.subr.bf16.mxu0 %v649
    %792 = vmatpush2.bf16.msra.mxu0 %v648
    %793 = vmatprep.subr.bf16.mxu0 %v647
    %794 = vmatpush2.bf16.msra.mxu0 %v646
    %795 = vmatprep.subr.bf16.mxu0 %v645
    %796 = vmatpush2.bf16.msra.mxu0 %v644
    %797 = vmatprep.mubr.bf16.mxu0 %v327
    %798 = vmatmul.mubr.bf16.gmra.mxu0 %v326
    %v799 = vpop.f32.mrf.mxu0
    %v800 = vadd.f32 %v759, %v799
    %v801 = vpop.f32.mrf.mxu0
    %v802 = vadd.f32 %v761, %v801
    %v803 = vpop.f32.mrf.mxu0
    %v804 = vpop.f32.mrf.mxu0
    %805 = vdwg.mxu0
    %v806 = vmax.f32 %v800, 0.0
    %v807 = vmax.f32 %v802, 0.0
    %v808 = vpack.c.bf16 %v806, %v806
    %v809 = vpack.c.bf16 %v807, %v807
    %v810 = vld [vmem:[#allocation11] sm:$0xff]
    %v811 = vld [vmem:[#allocation11 + $0x8] sm:$0xff]
    %v812 = vld [vmem:[#allocation11 + $0x10] sm:$0xff]
    %v813 = vld [vmem:[#allocation11 + $0x18] sm:$0xff]
    %v818 = vunpack.c.l.b16 %v810
    %v819 = vunpack.c.h.b16 %v810
    %v820 = vunpack.c.l.b16 %v811
    %v821 = vunpack.c.h.b16 %v811
    %v822 = vunpack.c.l.b16 %v812
    %v823 = vunpack.c.h.b16 %v812
    %v824 = vunpack.c.l.b16 %v813
    %v825 = vunpack.c.h.b16 %v813
    %v826 = vpack.c.b16 %v818, %v818
    %v827 = vpack.c.b16 %v819, %v819
    %v828 = vpack.c.b16 %v820, %v820
    %v829 = vpack.c.b16 %v821, %v821
    %v830 = vpack.c.b16 %v822, %v822
    %v831 = vpack.c.b16 %v823, %v823
    %v832 = vpack.c.b16 %v824, %v824
    %v833 = vpack.c.b16 %v825, %v825
    %v842 = vmul.bf16 %v808, %v826
    %v843 = vmul.bf16 %v809, %v827
    %v844 = vmul.bf16 %v808, %v828
    %v845 = vmul.bf16 %v809, %v829
    %v846 = vmul.bf16 %v808, %v830
    %v847 = vmul.bf16 %v809, %v831
    %v848 = vmul.bf16 %v808, %v832
    %v849 = vmul.bf16 %v809, %v833
    %v850 = vld [vmem:[#allocation13] sm:$0xff]
    %v851 = vld [vmem:[#allocation13 + $0x8] sm:$0xff]
    %v852 = vld [vmem:[#allocation13 + $0x10] sm:$0xff]
    %v853 = vld [vmem:[#allocation13 + $0x18] sm:$0xff]
    %v854 = vld [vmem:[#allocation13 + $0x20] sm:$0xff]
    %v855 = vld [vmem:[#allocation13 + $0x28] sm:$0xff]
    %v856 = vld [vmem:[#allocation13 + $0x30] sm:$0xff]
    %v857 = vld [vmem:[#allocation13 + $0x38] sm:$0xff]
    %v858 = vld [vmem:[#allocation13 + $0x40] sm:$0xff]
    %v859 = vld [vmem:[#allocation13 + $0x48] sm:$0xff]
    %v860 = vld [vmem:[#allocation13 + $0x50] sm:$0xff]
    %v861 = vld [vmem:[#allocation13 + $0x58] sm:$0xff]
    %v862 = vld [vmem:[#allocation13 + $0x60] sm:$0xff]
    %v863 = vld [vmem:[#allocation13 + $0x68] sm:$0xff]
    %v864 = vld [vmem:[#allocation13 + $0x70] sm:$0xff]
    %v865 = vld [vmem:[#allocation13 + $0x78] sm:$0xff]
    %v866 = vld [vmem:[#allocation13 + $0x80] sm:$0xff]
    %v867 = vld [vmem:[#allocation13 + $0x88] sm:$0xff]
    %v868 = vld [vmem:[#allocation13 + $0x90] sm:$0xff]
    %v869 = vld [vmem:[#allocation13 + $0x98] sm:$0xff]
    %v870 = vld [vmem:[#allocation13 + $0xa0] sm:$0xff]
    %v871 = vld [vmem:[#allocation13 + $0xa8] sm:$0xff]
    %v872 = vld [vmem:[#allocation13 + $0xb0] sm:$0xff]
    %v873 = vld [vmem:[#allocation13 + $0xb8] sm:$0xff]
    %v874 = vld [vmem:[#allocation13 + $0xc0] sm:$0xff]
    %v875 = vld [vmem:[#allocation13 + $0xc8] sm:$0xff]
    %v876 = vld [vmem:[#allocation13 + $0xd0] sm:$0xff]
    %v877 = vld [vmem:[#allocation13 + $0xd8] sm:$0xff]
    %v878 = vld [vmem:[#allocation13 + $0xe0] sm:$0xff]
    %v879 = vld [vmem:[#allocation13 + $0xe8] sm:$0xff]
    %v880 = vld [vmem:[#allocation13 + $0xf0] sm:$0xff]
    %v881 = vld [vmem:[#allocation13 + $0xf8] sm:$0xff]
    %v882 = vld [vmem:[#allocation13 + $0x100] sm:$0xff]
    %v883 = vld [vmem:[#allocation13 + $0x108] sm:$0xff]
    %v884 = vld [vmem:[#allocation13 + $0x110] sm:$0xff]
    %v885 = vld [vmem:[#allocation13 + $0x118] sm:$0xff]
    %v886 = vld [vmem:[#allocation13 + $0x120] sm:$0xff]
    %v887 = vld [vmem:[#allocation13 + $0x128] sm:$0xff]
    %v888 = vld [vmem:[#allocation13 + $0x130] sm:$0xff]
    %v889 = vld [vmem:[#allocation13 + $0x138] sm:$0xff]
    %v890 = vld [vmem:[#allocation13 + $0x140] sm:$0xff]
    %v891 = vld [vmem:[#allocation13 + $0x148] sm:$0xff]
    %v892 = vld [vmem:[#allocation13 + $0x150] sm:$0xff]
    %v893 = vld [vmem:[#allocation13 + $0x158] sm:$0xff]
    %v894 = vld [vmem:[#allocation13 + $0x160] sm:$0xff]
    %v895 = vld [vmem:[#allocation13 + $0x168] sm:$0xff]
    %v896 = vld [vmem:[#allocation13 + $0x170] sm:$0xff]
    %v897 = vld [vmem:[#allocation13 + $0x178] sm:$0xff]
    %v898 = vld [vmem:[#allocation13 + $0x180] sm:$0xff]
    %v899 = vld [vmem:[#allocation13 + $0x188] sm:$0xff]
    %v900 = vld [vmem:[#allocation13 + $0x190] sm:$0xff]
    %v901 = vld [vmem:[#allocation13 + $0x198] sm:$0xff]
    %v902 = vld [vmem:[#allocation13 + $0x1a0] sm:$0xff]
    %v903 = vld [vmem:[#allocation13 + $0x1a8] sm:$0xff]
    %v904 = vld [vmem:[#allocation13 + $0x1b0] sm:$0xff]
    %v905 = vld [vmem:[#allocation13 + $0x1b8] sm:$0xff]
    %v906 = vld [vmem:[#allocation13 + $0x1c0] sm:$0xff]
    %v907 = vld [vmem:[#allocation13 + $0x1c8] sm:$0xff]
    %v908 = vld [vmem:[#allocation13 + $0x1d0] sm:$0xff]
    %v909 = vld [vmem:[#allocation13 + $0x1d8] sm:$0xff]
    %v910 = vld [vmem:[#allocation13 + $0x1e0] sm:$0xff]
    %v911 = vld [vmem:[#allocation13 + $0x1e8] sm:$0xff]
    %v912 = vld [vmem:[#allocation13 + $0x1f0] sm:$0xff]
    %v913 = vld [vmem:[#allocation13 + $0x1f8] sm:$0xff]
    %v914 = vld [vmem:[#allocation13 + $0x200] sm:$0xff]
    %v915 = vld [vmem:[#allocation13 + $0x208] sm:$0xff]
    %v916 = vld [vmem:[#allocation13 + $0x210] sm:$0xff]
    %v917 = vld [vmem:[#allocation13 + $0x218] sm:$0xff]
    %v918 = vld [vmem:[#allocation13 + $0x220] sm:$0xff]
    %v919 = vld [vmem:[#allocation13 + $0x228] sm:$0xff]
    %v920 = vld [vmem:[#allocation13 + $0x230] sm:$0xff]
    %v921 = vld [vmem:[#allocation13 + $0x238] sm:$0xff]
    %v922 = vld [vmem:[#allocation13 + $0x240] sm:$0xff]
    %v923 = vld [vmem:[#allocation13 + $0x248] sm:$0xff]
    %v924 = vld [vmem:[#allocation13 + $0x250] sm:$0xff]
    %v925 = vld [vmem:[#allocation13 + $0x258] sm:$0xff]
    %v926 = vld [vmem:[#allocation13 + $0x260] sm:$0xff]
    %v927 = vld [vmem:[#allocation13 + $0x268] sm:$0xff]
    %v928 = vld [vmem:[#allocation13 + $0x270] sm:$0xff]
    %v929 = vld [vmem:[#allocation13 + $0x278] sm:$0xff]
    %v930 = vld [vmem:[#allocation13 + $0x280] sm:$0xff]
    %v931 = vld [vmem:[#allocation13 + $0x288] sm:$0xff]
    %v932 = vld [vmem:[#allocation13 + $0x290] sm:$0xff]
    %v933 = vld [vmem:[#allocation13 + $0x298] sm:$0xff]
    %v934 = vld [vmem:[#allocation13 + $0x2a0] sm:$0xff]
    %v935 = vld [vmem:[#allocation13 + $0x2a8] sm:$0xff]
    %v936 = vld [vmem:[#allocation13 + $0x2b0] sm:$0xff]
    %v937 = vld [vmem:[#allocation13 + $0x2b8] sm:$0xff]
    %v938 = vld [vmem:[#allocation13 + $0x2c0] sm:$0xff]
    %v939 = vld [vmem:[#allocation13 + $0x2c8] sm:$0xff]
    %v940 = vld [vmem:[#allocation13 + $0x2d0] sm:$0xff]
    %v941 = vld [vmem:[#allocation13 + $0x2d8] sm:$0xff]
    %v942 = vld [vmem:[#allocation13 + $0x2e0] sm:$0xff]
    %v943 = vld [vmem:[#allocation13 + $0x2e8] sm:$0xff]
    %v944 = vld [vmem:[#allocation13 + $0x2f0] sm:$0xff]
    %v945 = vld [vmem:[#allocation13 + $0x2f8] sm:$0xff]
    %v946 = vld [vmem:[#allocation13 + $0x300] sm:$0xff]
    %v947 = vld [vmem:[#allocation13 + $0x308] sm:$0xff]
    %v948 = vld [vmem:[#allocation13 + $0x310] sm:$0xff]
    %v949 = vld [vmem:[#allocation13 + $0x318] sm:$0xff]
    %v950 = vld [vmem:[#allocation13 + $0x320] sm:$0xff]
    %v951 = vld [vmem:[#allocation13 + $0x328] sm:$0xff]
    %v952 = vld [vmem:[#allocation13 + $0x330] sm:$0xff]
    %v953 = vld [vmem:[#allocation13 + $0x338] sm:$0xff]
    %v954 = vld [vmem:[#allocation13 + $0x340] sm:$0xff]
    %v955 = vld [vmem:[#allocation13 + $0x348] sm:$0xff]
    %v956 = vld [vmem:[#allocation13 + $0x350] sm:$0xff]
    %v957 = vld [vmem:[#allocation13 + $0x358] sm:$0xff]
    %v958 = vld [vmem:[#allocation13 + $0x360] sm:$0xff]
    %v959 = vld [vmem:[#allocation13 + $0x368] sm:$0xff]
    %v960 = vld [vmem:[#allocation13 + $0x370] sm:$0xff]
    %v961 = vld [vmem:[#allocation13 + $0x378] sm:$0xff]
    %v962 = vld [vmem:[#allocation13 + $0x380] sm:$0xff]
    %v963 = vld [vmem:[#allocation13 + $0x388] sm:$0xff]
    %v964 = vld [vmem:[#allocation13 + $0x390] sm:$0xff]
    %v965 = vld [vmem:[#allocation13 + $0x398] sm:$0xff]
    %v966 = vld [vmem:[#allocation13 + $0x3a0] sm:$0xff]
    %v967 = vld [vmem:[#allocation13 + $0x3a8] sm:$0xff]
    %v968 = vld [vmem:[#allocation13 + $0x3b0] sm:$0xff]
    %v969 = vld [vmem:[#allocation13 + $0x3b8] sm:$0xff]
    %v970 = vld [vmem:[#allocation13 + $0x3c0] sm:$0xff]
    %v971 = vld [vmem:[#allocation13 + $0x3c8] sm:$0xff]
    %v972 = vld [vmem:[#allocation13 + $0x3d0] sm:$0xff]
    %v973 = vld [vmem:[#allocation13 + $0x3d8] sm:$0xff]
    %v974 = vld [vmem:[#allocation13 + $0x3e0] sm:$0xff]
    %v975 = vld [vmem:[#allocation13 + $0x3e8] sm:$0xff]
    %v976 = vld [vmem:[#allocation13 + $0x3f0] sm:$0xff]
    %v977 = vld [vmem:[#allocation13 + $0x3f8] sm:$0xff]
    %v978 = vld [vmem:[%s10] sm:$0x3]
    %v980 = vlaneseq
    %v981 = vshrl.u32 %v980, 7
    %v982 = vsub.s32 0, %v981
    %v983 = vrot.slane %v978, %v982
    %v984 = vlaneseq
    %v985 = vshrl.u32 %v984, 7
    %v986 = vsub.s32 1, %v985
    %v987 = vrot.slane %v978, %v986
    %v1118 = vunpack.c.l.b16 %v850
    %v1119 = vunpack.c.h.b16 %v850
    %v1120 = vunpack.c.l.b16 %v851
    %v1121 = vunpack.c.h.b16 %v851
    %v1122 = vunpack.c.l.b16 %v852
    %v1123 = vunpack.c.h.b16 %v852
    %v1124 = vunpack.c.l.b16 %v853
    %v1125 = vunpack.c.h.b16 %v853
    %v1126 = vunpack.c.l.b16 %v854
    %v1127 = vunpack.c.h.b16 %v854
    %v1128 = vunpack.c.l.b16 %v855
    %v1129 = vunpack.c.h.b16 %v855
    %v1130 = vunpack.c.l.b16 %v856
    %v1131 = vunpack.c.h.b16 %v856
    %v1132 = vunpack.c.l.b16 %v857
    %v1133 = vunpack.c.h.b16 %v857
    %v1134 = vunpack.c.l.b16 %v858
    %v1135 = vunpack.c.h.b16 %v858
    %v1136 = vunpack.c.l.b16 %v859
    %v1137 = vunpack.c.h.b16 %v859
    %v1138 = vunpack.c.l.b16 %v860
    %v1139 = vunpack.c.h.b16 %v860
    %v1140 = vunpack.c.l.b16 %v861
    %v1141 = vunpack.c.h.b16 %v861
    %v1142 = vunpack.c.l.b16 %v862
    %v1143 = vunpack.c.h.b16 %v862
    %v1144 = vunpack.c.l.b16 %v863
    %v1145 = vunpack.c.h.b16 %v863
    %v1146 = vunpack.c.l.b16 %v864
    %v1147 = vunpack.c.h.b16 %v864
    %v1148 = vunpack.c.l.b16 %v865
    %v1149 = vunpack.c.h.b16 %v865
    %v1150 = vunpack.c.l.b16 %v866
    %v1151 = vunpack.c.h.b16 %v866
    %v1152 = vunpack.c.l.b16 %v867
    %v1153 = vunpack.c.h.b16 %v867
    %v1154 = vunpack.c.l.b16 %v868
    %v1155 = vunpack.c.h.b16 %v868
    %v1156 = vunpack.c.l.b16 %v869
    %v1157 = vunpack.c.h.b16 %v869
    %v1158 = vunpack.c.l.b16 %v870
    %v1159 = vunpack.c.h.b16 %v870
    %v1160 = vunpack.c.l.b16 %v871
    %v1161 = vunpack.c.h.b16 %v871
    %v1162 = vunpack.c.l.b16 %v872
    %v1163 = vunpack.c.h.b16 %v872
    %v1164 = vunpack.c.l.b16 %v873
    %v1165 = vunpack.c.h.b16 %v873
    %v1166 = vunpack.c.l.b16 %v874
    %v1167 = vunpack.c.h.b16 %v874
    %v1168 = vunpack.c.l.b16 %v875
    %v1169 = vunpack.c.h.b16 %v875
    %v1170 = vunpack.c.l.b16 %v876
    %v1171 = vunpack.c.h.b16 %v876
    %v1172 = vunpack.c.l.b16 %v877
    %v1173 = vunpack.c.h.b16 %v877
    %v1174 = vunpack.c.l.b16 %v878
    %v1175 = vunpack.c.h.b16 %v878
    %v1176 = vunpack.c.l.b16 %v879
    %v1177 = vunpack.c.h.b16 %v879
    %v1178 = vunpack.c.l.b16 %v880
    %v1179 = vunpack.c.h.b16 %v880
    %v1180 = vunpack.c.l.b16 %v881
    %v1181 = vunpack.c.h.b16 %v881
    %v1182 = vunpack.c.l.b16 %v882
    %v1183 = vunpack.c.h.b16 %v882
    %v1184 = vunpack.c.l.b16 %v883
    %v1185 = vunpack.c.h.b16 %v883
    %v1186 = vunpack.c.l.b16 %v884
    %v1187 = vunpack.c.h.b16 %v884
    %v1188 = vunpack.c.l.b16 %v885
    %v1189 = vunpack.c.h.b16 %v885
    %v1190 = vunpack.c.l.b16 %v886
    %v1191 = vunpack.c.h.b16 %v886
    %v1192 = vunpack.c.l.b16 %v887
    %v1193 = vunpack.c.h.b16 %v887
    %v1194 = vunpack.c.l.b16 %v888
    %v1195 = vunpack.c.h.b16 %v888
    %v1196 = vunpack.c.l.b16 %v889
    %v1197 = vunpack.c.h.b16 %v889
    %v1198 = vunpack.c.l.b16 %v890
    %v1199 = vunpack.c.h.b16 %v890
    %v1200 = vunpack.c.l.b16 %v891
    %v1201 = vunpack.c.h.b16 %v891
    %v1202 = vunpack.c.l.b16 %v892
    %v1203 = vunpack.c.h.b16 %v892
    %v1204 = vunpack.c.l.b16 %v893
    %v1205 = vunpack.c.h.b16 %v893
    %v1206 = vunpack.c.l.b16 %v894
    %v1207 = vunpack.c.h.b16 %v894
    %v1208 = vunpack.c.l.b16 %v895
    %v1209 = vunpack.c.h.b16 %v895
    %v1210 = vunpack.c.l.b16 %v896
    %v1211 = vunpack.c.h.b16 %v896
    %v1212 = vunpack.c.l.b16 %v897
    %v1213 = vunpack.c.h.b16 %v897
    %v1214 = vunpack.c.l.b16 %v898
    %v1215 = vunpack.c.h.b16 %v898
    %v1216 = vunpack.c.l.b16 %v899
    %v1217 = vunpack.c.h.b16 %v899
    %v1218 = vunpack.c.l.b16 %v900
    %v1219 = vunpack.c.h.b16 %v900
    %v1220 = vunpack.c.l.b16 %v901
    %v1221 = vunpack.c.h.b16 %v901
    %v1222 = vunpack.c.l.b16 %v902
    %v1223 = vunpack.c.h.b16 %v902
    %v1224 = vunpack.c.l.b16 %v903
    %v1225 = vunpack.c.h.b16 %v903
    %v1226 = vunpack.c.l.b16 %v904
    %v1227 = vunpack.c.h.b16 %v904
    %v1228 = vunpack.c.l.b16 %v905
    %v1229 = vunpack.c.h.b16 %v905
    %v1230 = vunpack.c.l.b16 %v906
    %v1231 = vunpack.c.h.b16 %v906
    %v1232 = vunpack.c.l.b16 %v907
    %v1233 = vunpack.c.h.b16 %v907
    %v1234 = vunpack.c.l.b16 %v908
    %v1235 = vunpack.c.h.b16 %v908
    %v1236 = vunpack.c.l.b16 %v909
    %v1237 = vunpack.c.h.b16 %v909
    %v1238 = vunpack.c.l.b16 %v910
    %v1239 = vunpack.c.h.b16 %v910
    %v1240 = vunpack.c.l.b16 %v911
    %v1241 = vunpack.c.h.b16 %v911
    %v1242 = vunpack.c.l.b16 %v912
    %v1243 = vunpack.c.h.b16 %v912
    %v1244 = vunpack.c.l.b16 %v913
    %v1245 = vunpack.c.h.b16 %v913
    %v1246 = vunpack.c.l.b16 %v914
    %v1247 = vunpack.c.h.b16 %v914
    %v1248 = vunpack.c.l.b16 %v915
    %v1249 = vunpack.c.h.b16 %v915
    %v1250 = vunpack.c.l.b16 %v916
    %v1251 = vunpack.c.h.b16 %v916
    %v1252 = vunpack.c.l.b16 %v917
    %v1253 = vunpack.c.h.b16 %v917
    %v1254 = vunpack.c.l.b16 %v918
    %v1255 = vunpack.c.h.b16 %v918
    %v1256 = vunpack.c.l.b16 %v919
    %v1257 = vunpack.c.h.b16 %v919
    %v1258 = vunpack.c.l.b16 %v920
    %v1259 = vunpack.c.h.b16 %v920
    %v1260 = vunpack.c.l.b16 %v921
    %v1261 = vunpack.c.h.b16 %v921
    %v1262 = vunpack.c.l.b16 %v922
    %v1263 = vunpack.c.h.b16 %v922
    %v1264 = vunpack.c.l.b16 %v923
    %v1265 = vunpack.c.h.b16 %v923
    %v1266 = vunpack.c.l.b16 %v924
    %v1267 = vunpack.c.h.b16 %v924
    %v1268 = vunpack.c.l.b16 %v925
    %v1269 = vunpack.c.h.b16 %v925
    %v1270 = vunpack.c.l.b16 %v926
    %v1271 = vunpack.c.h.b16 %v926
    %v1272 = vunpack.c.l.b16 %v927
    %v1273 = vunpack.c.h.b16 %v927
    %v1274 = vunpack.c.l.b16 %v928
    %v1275 = vunpack.c.h.b16 %v928
    %v1276 = vunpack.c.l.b16 %v929
    %v1277 = vunpack.c.h.b16 %v929
    %v1278 = vunpack.c.l.b16 %v930
    %v1279 = vunpack.c.h.b16 %v930
    %v1280 = vunpack.c.l.b16 %v931
    %v1281 = vunpack.c.h.b16 %v931
    %v1282 = vunpack.c.l.b16 %v932
    %v1283 = vunpack.c.h.b16 %v932
    %v1284 = vunpack.c.l.b16 %v933
    %v1285 = vunpack.c.h.b16 %v933
    %v1286 = vunpack.c.l.b16 %v934
    %v1287 = vunpack.c.h.b16 %v934
    %v1288 = vunpack.c.l.b16 %v935
    %v1289 = vunpack.c.h.b16 %v935
    %v1290 = vunpack.c.l.b16 %v936
    %v1291 = vunpack.c.h.b16 %v936
    %v1292 = vunpack.c.l.b16 %v937
    %v1293 = vunpack.c.h.b16 %v937
    %v1294 = vunpack.c.l.b16 %v938
    %v1295 = vunpack.c.h.b16 %v938
    %v1296 = vunpack.c.l.b16 %v939
    %v1297 = vunpack.c.h.b16 %v939
    %v1298 = vunpack.c.l.b16 %v940
    %v1299 = vunpack.c.h.b16 %v940
    %v1300 = vunpack.c.l.b16 %v941
    %v1301 = vunpack.c.h.b16 %v941
    %v1302 = vunpack.c.l.b16 %v942
    %v1303 = vunpack.c.h.b16 %v942
    %v1304 = vunpack.c.l.b16 %v943
    %v1305 = vunpack.c.h.b16 %v943
    %v1306 = vunpack.c.l.b16 %v944
    %v1307 = vunpack.c.h.b16 %v944
    %v1308 = vunpack.c.l.b16 %v945
    %v1309 = vunpack.c.h.b16 %v945
    %v1310 = vunpack.c.l.b16 %v946
    %v1311 = vunpack.c.h.b16 %v946
    %v1312 = vunpack.c.l.b16 %v947
    %v1313 = vunpack.c.h.b16 %v947
    %v1314 = vunpack.c.l.b16 %v948
    %v1315 = vunpack.c.h.b16 %v948
    %v1316 = vunpack.c.l.b16 %v949
    %v1317 = vunpack.c.h.b16 %v949
    %v1318 = vunpack.c.l.b16 %v950
    %v1319 = vunpack.c.h.b16 %v950
    %v1320 = vunpack.c.l.b16 %v951
    %v1321 = vunpack.c.h.b16 %v951
    %v1322 = vunpack.c.l.b16 %v952
    %v1323 = vunpack.c.h.b16 %v952
    %v1324 = vunpack.c.l.b16 %v953
    %v1325 = vunpack.c.h.b16 %v953
    %v1326 = vunpack.c.l.b16 %v954
    %v1327 = vunpack.c.h.b16 %v954
    %v1328 = vunpack.c.l.b16 %v955
    %v1329 = vunpack.c.h.b16 %v955
    %v1330 = vunpack.c.l.b16 %v956
    %v1331 = vunpack.c.h.b16 %v956
    %v1332 = vunpack.c.l.b16 %v957
    %v1333 = vunpack.c.h.b16 %v957
    %v1334 = vunpack.c.l.b16 %v958
    %v1335 = vunpack.c.h.b16 %v958
    %v1336 = vunpack.c.l.b16 %v959
    %v1337 = vunpack.c.h.b16 %v959
    %v1338 = vunpack.c.l.b16 %v960
    %v1339 = vunpack.c.h.b16 %v960
    %v1340 = vunpack.c.l.b16 %v961
    %v1341 = vunpack.c.h.b16 %v961
    %v1342 = vunpack.c.l.b16 %v962
    %v1343 = vunpack.c.h.b16 %v962
    %v1344 = vunpack.c.l.b16 %v963
    %v1345 = vunpack.c.h.b16 %v963
    %v1346 = vunpack.c.l.b16 %v964
    %v1347 = vunpack.c.h.b16 %v964
    %v1348 = vunpack.c.l.b16 %v965
    %v1349 = vunpack.c.h.b16 %v965
    %v1350 = vunpack.c.l.b16 %v966
    %v1351 = vunpack.c.h.b16 %v966
    %v1352 = vunpack.c.l.b16 %v967
    %v1353 = vunpack.c.h.b16 %v967
    %v1354 = vunpack.c.l.b16 %v968
    %v1355 = vunpack.c.h.b16 %v968
    %v1356 = vunpack.c.l.b16 %v969
    %v1357 = vunpack.c.h.b16 %v969
    %v1358 = vunpack.c.l.b16 %v970
    %v1359 = vunpack.c.h.b16 %v970
    %v1360 = vunpack.c.l.b16 %v971
    %v1361 = vunpack.c.h.b16 %v971
    %v1362 = vunpack.c.l.b16 %v972
    %v1363 = vunpack.c.h.b16 %v972
    %v1364 = vunpack.c.l.b16 %v973
    %v1365 = vunpack.c.h.b16 %v973
    %v1366 = vunpack.c.l.b16 %v974
    %v1367 = vunpack.c.h.b16 %v974
    %v1368 = vunpack.c.l.b16 %v975
    %v1369 = vunpack.c.h.b16 %v975
    %v1370 = vunpack.c.l.b16 %v976
    %v1371 = vunpack.c.h.b16 %v976
    %v1372 = vunpack.c.l.b16 %v977
    %v1373 = vunpack.c.h.b16 %v977
    %v1374 = vpack.c.b16 %v1120, %v1118
    %v1375 = vpack.c.b16 %v1121, %v1119
    %v1376 = vpack.c.b16 %v1124, %v1122
    %v1377 = vpack.c.b16 %v1125, %v1123
    %v1378 = vpack.c.b16 %v1128, %v1126
    %v1379 = vpack.c.b16 %v1129, %v1127
    %v1380 = vpack.c.b16 %v1132, %v1130
    %v1381 = vpack.c.b16 %v1133, %v1131
    %v1382 = vpack.c.b16 %v1136, %v1134
    %v1383 = vpack.c.b16 %v1137, %v1135
    %v1384 = vpack.c.b16 %v1140, %v1138
    %v1385 = vpack.c.b16 %v1141, %v1139
    %v1386 = vpack.c.b16 %v1144, %v1142
    %v1387 = vpack.c.b16 %v1145, %v1143
    %v1388 = vpack.c.b16 %v1148, %v1146
    %v1389 = vpack.c.b16 %v1149, %v1147
    %v1390 = vpack.c.b16 %v1152, %v1150
    %v1391 = vpack.c.b16 %v1153, %v1151
    %v1392 = vpack.c.b16 %v1156, %v1154
    %v1393 = vpack.c.b16 %v1157, %v1155
    %v1394 = vpack.c.b16 %v1160, %v1158
    %v1395 = vpack.c.b16 %v1161, %v1159
    %v1396 = vpack.c.b16 %v1164, %v1162
    %v1397 = vpack.c.b16 %v1165, %v1163
    %v1398 = vpack.c.b16 %v1168, %v1166
    %v1399 = vpack.c.b16 %v1169, %v1167
    %v1400 = vpack.c.b16 %v1172, %v1170
    %v1401 = vpack.c.b16 %v1173, %v1171
    %v1402 = vpack.c.b16 %v1176, %v1174
    %v1403 = vpack.c.b16 %v1177, %v1175
    %v1404 = vpack.c.b16 %v1180, %v1178
    %v1405 = vpack.c.b16 %v1181, %v1179
    %v1406 = vpack.c.b16 %v1184, %v1182
    %v1407 = vpack.c.b16 %v1185, %v1183
    %v1408 = vpack.c.b16 %v1188, %v1186
    %v1409 = vpack.c.b16 %v1189, %v1187
    %v1410 = vpack.c.b16 %v1192, %v1190
    %v1411 = vpack.c.b16 %v1193, %v1191
    %v1412 = vpack.c.b16 %v1196, %v1194
    %v1413 = vpack.c.b16 %v1197, %v1195
    %v1414 = vpack.c.b16 %v1200, %v1198
    %v1415 = vpack.c.b16 %v1201, %v1199
    %v1416 = vpack.c.b16 %v1204, %v1202
    %v1417 = vpack.c.b16 %v1205, %v1203
    %v1418 = vpack.c.b16 %v1208, %v1206
    %v1419 = vpack.c.b16 %v1209, %v1207
    %v1420 = vpack.c.b16 %v1212, %v1210
    %v1421 = vpack.c.b16 %v1213, %v1211
    %v1422 = vpack.c.b16 %v1216, %v1214
    %v1423 = vpack.c.b16 %v1217, %v1215
    %v1424 = vpack.c.b16 %v1220, %v1218
    %v1425 = vpack.c.b16 %v1221, %v1219
    %v1426 = vpack.c.b16 %v1224, %v1222
    %v1427 = vpack.c.b16 %v1225, %v1223
    %v1428 = vpack.c.b16 %v1228, %v1226
    %v1429 = vpack.c.b16 %v1229, %v1227
    %v1430 = vpack.c.b16 %v1232, %v1230
    %v1431 = vpack.c.b16 %v1233, %v1231
    %v1432 = vpack.c.b16 %v1236, %v1234
    %v1433 = vpack.c.b16 %v1237, %v1235
    %v1434 = vpack.c.b16 %v1240, %v1238
    %v1435 = vpack.c.b16 %v1241, %v1239
    %v1436 = vpack.c.b16 %v1244, %v1242
    %v1437 = vpack.c.b16 %v1245, %v1243
    %v1438 = vpack.c.b16 %v1248, %v1246
    %v1439 = vpack.c.b16 %v1249, %v1247
    %v1440 = vpack.c.b16 %v1252, %v1250
    %v1441 = vpack.c.b16 %v1253, %v1251
    %v1442 = vpack.c.b16 %v1256, %v1254
    %v1443 = vpack.c.b16 %v1257, %v1255
    %v1444 = vpack.c.b16 %v1260, %v1258
    %v1445 = vpack.c.b16 %v1261, %v1259
    %v1446 = vpack.c.b16 %v1264, %v1262
    %v1447 = vpack.c.b16 %v1265, %v1263
    %v1448 = vpack.c.b16 %v1268, %v1266
    %v1449 = vpack.c.b16 %v1269, %v1267
    %v1450 = vpack.c.b16 %v1272, %v1270
    %v1451 = vpack.c.b16 %v1273, %v1271
    %v1452 = vpack.c.b16 %v1276, %v1274
    %v1453 = vpack.c.b16 %v1277, %v1275
    %v1454 = vpack.c.b16 %v1280, %v1278
    %v1455 = vpack.c.b16 %v1281, %v1279
    %v1456 = vpack.c.b16 %v1284, %v1282
    %v1457 = vpack.c.b16 %v1285, %v1283
    %v1458 = vpack.c.b16 %v1288, %v1286
    %v1459 = vpack.c.b16 %v1289, %v1287
    %v1460 = vpack.c.b16 %v1292, %v1290
    %v1461 = vpack.c.b16 %v1293, %v1291
    %v1462 = vpack.c.b16 %v1296, %v1294
    %v1463 = vpack.c.b16 %v1297, %v1295
    %v1464 = vpack.c.b16 %v1300, %v1298
    %v1465 = vpack.c.b16 %v1301, %v1299
    %v1466 = vpack.c.b16 %v1304, %v1302
    %v1467 = vpack.c.b16 %v1305, %v1303
    %v1468 = vpack.c.b16 %v1308, %v1306
    %v1469 = vpack.c.b16 %v1309, %v1307
    %v1470 = vpack.c.b16 %v1312, %v1310
    %v1471 = vpack.c.b16 %v1313, %v1311
    %v1472 = vpack.c.b16 %v1316, %v1314
    %v1473 = vpack.c.b16 %v1317, %v1315
    %v1474 = vpack.c.b16 %v1320, %v1318
    %v1475 = vpack.c.b16 %v1321, %v1319
    %v1476 = vpack.c.b16 %v1324, %v1322
    %v1477 = vpack.c.b16 %v1325, %v1323
    %v1478 = vpack.c.b16 %v1328, %v1326
    %v1479 = vpack.c.b16 %v1329, %v1327
    %v1480 = vpack.c.b16 %v1332, %v1330
    %v1481 = vpack.c.b16 %v1333, %v1331
    %v1482 = vpack.c.b16 %v1336, %v1334
    %v1483 = vpack.c.b16 %v1337, %v1335
    %v1484 = vpack.c.b16 %v1340, %v1338
    %v1485 = vpack.c.b16 %v1341, %v1339
    %v1486 = vpack.c.b16 %v1344, %v1342
    %v1487 = vpack.c.b16 %v1345, %v1343
    %v1488 = vpack.c.b16 %v1348, %v1346
    %v1489 = vpack.c.b16 %v1349, %v1347
    %v1490 = vpack.c.b16 %v1352, %v1350
    %v1491 = vpack.c.b16 %v1353, %v1351
    %v1492 = vpack.c.b16 %v1356, %v1354
    %v1493 = vpack.c.b16 %v1357, %v1355
    %v1494 = vpack.c.b16 %v1360, %v1358
    %v1495 = vpack.c.b16 %v1361, %v1359
    %v1496 = vpack.c.b16 %v1364, %v1362
    %v1497 = vpack.c.b16 %v1365, %v1363
    %v1498 = vpack.c.b16 %v1368, %v1366
    %v1499 = vpack.c.b16 %v1369, %v1367
    %v1500 = vpack.c.b16 %v1372, %v1370
    %v1501 = vpack.c.b16 %v1373, %v1371
    %1630 = vmatprep.subr.bf16.mxu0 %v1389
    %1631 = vmatpush1.bf16.msra.mxu0 %v1388
    %1632 = vmatprep.subr.bf16.mxu0 %v1387
    %1633 = vmatpush1.bf16.msra.mxu0 %v1386
    %1634 = vmatprep.subr.bf16.mxu0 %v1385
    %1635 = vmatpush1.bf16.msra.mxu0 %v1384
    %1636 = vmatprep.subr.bf16.mxu0 %v1383
    %1637 = vmatpush1.bf16.msra.mxu0 %v1382
    %1638 = vmatprep.subr.bf16.mxu0 %v1381
    %1639 = vmatpush1.bf16.msra.mxu0 %v1380
    %1640 = vmatprep.subr.bf16.mxu0 %v1379
    %1641 = vmatpush1.bf16.msra.mxu0 %v1378
    %1642 = vmatprep.subr.bf16.mxu0 %v1377
    %1643 = vmatpush1.bf16.msra.mxu0 %v1376
    %1644 = vmatprep.subr.bf16.mxu0 %v1375
    %1645 = vmatpush1.bf16.msra.mxu0 %v1374
    %1646 = vmatprep.subr.bf16.mxu0 %v1405
    %1647 = vmatpush2.bf16.msra.mxu0 %v1404
    %1648 = vmatprep.subr.bf16.mxu0 %v1403
    %1649 = vmatpush2.bf16.msra.mxu0 %v1402
    %1650 = vmatprep.subr.bf16.mxu0 %v1401
    %1651 = vmatpush2.bf16.msra.mxu0 %v1400
    %1652 = vmatprep.subr.bf16.mxu0 %v1399
    %1653 = vmatpush2.bf16.msra.mxu0 %v1398
    %1654 = vmatprep.subr.bf16.mxu0 %v1397
    %1655 = vmatpush2.bf16.msra.mxu0 %v1396
    %1656 = vmatprep.subr.bf16.mxu0 %v1395
    %1657 = vmatpush2.bf16.msra.mxu0 %v1394
    %1658 = vmatprep.subr.bf16.mxu0 %v1393
    %1659 = vmatpush2.bf16.msra.mxu0 %v1392
    %1660 = vmatprep.subr.bf16.mxu0 %v1391
    %1661 = vmatpush2.bf16.msra.mxu0 %v1390
    %1662 = vmatprep.mubr.bf16.mxu0 %v843
    %1663 = vmatmul.mubr.bf16.gmra.mxu0 %v842
    %v1664 = vpop.f32.mrf.mxu0
    %v1665 = vadd.f32 %v983, %v1664
    %v1666 = vpop.f32.mrf.mxu0
    %v1667 = vadd.f32 %v987, %v1666
    %v1668 = vpop.f32.mrf.mxu0
    %v1669 = vpop.f32.mrf.mxu0
    %1670 = vdwg.mxu0
    %1671 = vmatprep.subr.bf16.mxu0 %v1421
    %1672 = vmatpush1.bf16.msra.mxu0 %v1420
    %1673 = vmatprep.subr.bf16.mxu0 %v1419
    %1674 = vmatpush1.bf16.msra.mxu0 %v1418
    %1675 = vmatprep.subr.bf16.mxu0 %v1417
    %1676 = vmatpush1.bf16.msra.mxu0 %v1416
    %1677 = vmatprep.subr.bf16.mxu0 %v1415
    %1678 = vmatpush1.bf16.msra.mxu0 %v1414
    %1679 = vmatprep.subr.bf16.mxu0 %v1413
    %1680 = vmatpush1.bf16.msra.mxu0 %v1412
    %1681 = vmatprep.subr.bf16.mxu0 %v1411
    %1682 = vmatpush1.bf16.msra.mxu0 %v1410
    %1683 = vmatprep.subr.bf16.mxu0 %v1409
    %1684 = vmatpush1.bf16.msra.mxu0 %v1408
    %1685 = vmatprep.subr.bf16.mxu0 %v1407
    %1686 = vmatpush1.bf16.msra.mxu0 %v1406
    %1687 = vmatprep.subr.bf16.mxu0 %v1437
    %1688 = vmatpush2.bf16.msra.mxu0 %v1436
    %1689 = vmatprep.subr.bf16.mxu0 %v1435
    %1690 = vmatpush2.bf16.msra.mxu0 %v1434
    %1691 = vmatprep.subr.bf16.mxu0 %v1433
    %1692 = vmatpush2.bf16.msra.mxu0 %v1432
    %1693 = vmatprep.subr.bf16.mxu0 %v1431
    %1694 = vmatpush2.bf16.msra.mxu0 %v1430
    %1695 = vmatprep.subr.bf16.mxu0 %v1429
    %1696 = vmatpush2.bf16.msra.mxu0 %v1428
    %1697 = vmatprep.subr.bf16.mxu0 %v1427
    %1698 = vmatpush2.bf16.msra.mxu0 %v1426
    %1699 = vmatprep.subr.bf16.mxu0 %v1425
    %1700 = vmatpush2.bf16.msra.mxu0 %v1424
    %1701 = vmatprep.subr.bf16.mxu0 %v1423
    %1702 = vmatpush2.bf16.msra.mxu0 %v1422
    %1703 = vmatprep.mubr.bf16.mxu0 %v845
    %1704 = vmatmul.mubr.bf16.gmra.mxu0 %v844
    %v1705 = vpop.f32.mrf.mxu0
    %v1706 = vadd.f32 %v1665, %v1705
    %v1707 = vpop.f32.mrf.mxu0
    %v1708 = vadd.f32 %v1667, %v1707
    %v1709 = vpop.f32.mrf.mxu0
    %v1710 = vpop.f32.mrf.mxu0
    %1711 = vdwg.mxu0
    %1712 = vmatprep.subr.bf16.mxu0 %v1453
    %1713 = vmatpush1.bf16.msra.mxu0 %v1452
    %1714 = vmatprep.subr.bf16.mxu0 %v1451
    %1715 = vmatpush1.bf16.msra.mxu0 %v1450
    %1716 = vmatprep.subr.bf16.mxu0 %v1449
    %1717 = vmatpush1.bf16.msra.mxu0 %v1448
    %1718 = vmatprep.subr.bf16.mxu0 %v1447
    %1719 = vmatpush1.bf16.msra.mxu0 %v1446
    %1720 = vmatprep.subr.bf16.mxu0 %v1445
    %1721 = vmatpush1.bf16.msra.mxu0 %v1444
    %1722 = vmatprep.subr.bf16.mxu0 %v1443
    %1723 = vmatpush1.bf16.msra.mxu0 %v1442
    %1724 = vmatprep.subr.bf16.mxu0 %v1441
    %1725 = vmatpush1.bf16.msra.mxu0 %v1440
    %1726 = vmatprep.subr.bf16.mxu0 %v1439
    %1727 = vmatpush1.bf16.msra.mxu0 %v1438
    %1728 = vmatprep.subr.bf16.mxu0 %v1469
    %1729 = vmatpush2.bf16.msra.mxu0 %v1468
    %1730 = vmatprep.subr.bf16.mxu0 %v1467
    %1731 = vmatpush2.bf16.msra.mxu0 %v1466
    %1732 = vmatprep.subr.bf16.mxu0 %v1465
    %1733 = vmatpush2.bf16.msra.mxu0 %v1464
    %1734 = vmatprep.subr.bf16.mxu0 %v1463
    %1735 = vmatpush2.bf16.msra.mxu0 %v1462
    %1736 = vmatprep.subr.bf16.mxu0 %v1461
    %1737 = vmatpush2.bf16.msra.mxu0 %v1460
    %1738 = vmatprep.subr.bf16.mxu0 %v1459
    %1739 = vmatpush2.bf16.msra.mxu0 %v1458
    %1740 = vmatprep.subr.bf16.mxu0 %v1457
    %1741 = vmatpush2.bf16.msra.mxu0 %v1456
    %1742 = vmatprep.subr.bf16.mxu0 %v1455
    %1743 = vmatpush2.bf16.msra.mxu0 %v1454
    %1744 = vmatprep.mubr.bf16.mxu0 %v847
    %1745 = vmatmul.mubr.bf16.gmra.mxu0 %v846
    %v1746 = vpop.f32.mrf.mxu0
    %v1747 = vadd.f32 %v1706, %v1746
    %v1748 = vpop.f32.mrf.mxu0
    %v1749 = vadd.f32 %v1708, %v1748
    %v1750 = vpop.f32.mrf.mxu0
    %v1751 = vpop.f32.mrf.mxu0
    %1752 = vdwg.mxu0
    %1753 = vmatprep.subr.bf16.mxu0 %v1485
    %1754 = vmatpush1.bf16.msra.mxu0 %v1484
    %1755 = vmatprep.subr.bf16.mxu0 %v1483
    %1756 = vmatpush1.bf16.msra.mxu0 %v1482
    %1757 = vmatprep.subr.bf16.mxu0 %v1481
    %1758 = vmatpush1.bf16.msra.mxu0 %v1480
    %1759 = vmatprep.subr.bf16.mxu0 %v1479
    %1760 = vmatpush1.bf16.msra.mxu0 %v1478
    %1761 = vmatprep.subr.bf16.mxu0 %v1477
    %1762 = vmatpush1.bf16.msra.mxu0 %v1476
    %1763 = vmatprep.subr.bf16.mxu0 %v1475
    %1764 = vmatpush1.bf16.msra.mxu0 %v1474
    %1765 = vmatprep.subr.bf16.mxu0 %v1473
    %1766 = vmatpush1.bf16.msra.mxu0 %v1472
    %1767 = vmatprep.subr.bf16.mxu0 %v1471
    %1768 = vmatpush1.bf16.msra.mxu0 %v1470
    %1769 = vmatprep.subr.bf16.mxu0 %v1501
    %1770 = vmatpush2.bf16.msra.mxu0 %v1500
    %1771 = vmatprep.subr.bf16.mxu0 %v1499
    %1772 = vmatpush2.bf16.msra.mxu0 %v1498
    %1773 = vmatprep.subr.bf16.mxu0 %v1497
    %1774 = vmatpush2.bf16.msra.mxu0 %v1496
    %1775 = vmatprep.subr.bf16.mxu0 %v1495
    %1776 = vmatpush2.bf16.msra.mxu0 %v1494
    %1777 = vmatprep.subr.bf16.mxu0 %v1493
    %1778 = vmatpush2.bf16.msra.mxu0 %v1492
    %1779 = vmatprep.subr.bf16.mxu0 %v1491
    %1780 = vmatpush2.bf16.msra.mxu0 %v1490
    %1781 = vmatprep.subr.bf16.mxu0 %v1489
    %1782 = vmatpush2.bf16.msra.mxu0 %v1488
    %1783 = vmatprep.subr.bf16.mxu0 %v1487
    %1784 = vmatpush2.bf16.msra.mxu0 %v1486
    %1785 = vmatprep.mubr.bf16.mxu0 %v849
    %1786 = vmatmul.mubr.bf16.gmra.mxu0 %v848
    %v1787 = vpop.f32.mrf.mxu0
    %v1788 = vadd.f32 %v1747, %v1787
    %v1789 = vpop.f32.mrf.mxu0
    %v1790 = vadd.f32 %v1749, %v1789
    %v1791 = vpop.f32.mrf.mxu0
    %v1792 = vpop.f32.mrf.mxu0
    %1793 = vdwg.mxu0
    %1794 = vst [vmem:[#allocation14] sm:$0xff] %v1788
    %1795 = vst [vmem:[#allocation14 + $0x8] sm:$0xff] %v1790
    // Predicated region
    $region74: #{tpu_custom_call.1} parent=1 // pred_check
      _
    $region75: #{tpu_custom_call.1} parent=1 // pred_check_branch
      %1797 = sbr.rel (0) target = $region77
    $region76: #{tpu_custom_call.1} parent=1 // pred_region
      %s1799 = ssub.s32 256, 256
      %1800 = vsyncadd [#allocation4], %s1799
      %s1802 = sshll.u32 [#allocation14], 4
      %s1803 = int_to_ptr.vmem [resolvable:$true] %s1802
      %1805 = dma.vmem_to_hbm [thread:$0]  %s1803, 256, %s11, [#allocation4]
    $region77: #{tpu_custom_call.1} parent=1 // pred_fallthru
      _
    // Predicated region
    $region78: #{tpu_custom_call.1} parent=1 // pred_check
      _
    $region79: #{tpu_custom_call.1} parent=1 // pred_check_branch
      %1807 = sbr.rel (0) target = $region81
    $region80: #{tpu_custom_call.1} parent=1 // pred_region
      %1808 = dma.done [#allocation4], 256
    $region81: #{tpu_custom_call.1} parent=1 // pred_fallthru
      _
    %1809 = vsyncpa [#allocation3], 1
    %1810 = vsyncpa [#allocation6], 1
    %1811 = vsyncpa [#allocation9], 1
    %1812 = vsyncpa [#allocation12], 1
    %1813 = vsyncpa [#allocation4], 1

</llo_original>
